<compile_context>
chip_gen: v7x
topology: tpu7x:2x2x1
jax: 0.10.0
libtpu: 0.0.40
codegen_flags: <defaults>
</compile_context>

<pallas_src>
import jax
import jax.numpy as jnp
from jax.experimental import pallas as pl
from jax.experimental.pallas import tpu as pltpu

N_EMBED = 384          # `n_embed` in the PyTorch module
HEAD_SIZE = 64
BLOCK_SIZE = 256       # `block_size` (max T the tril buffer supports)


# ----------------------------------------------------------------------------- helpers

def make_wqkv(wq, wk, wv):
    """Build the fused projection weight once at init: (C, 3H) bf16, layout [q | k | v].

    The reference scales scores by 1/sqrt(n_embed) (note: n_embed, not head_size, per the
    spec's `C ** 0.5`); we fold that scale into the q columns so the kernel does no
    per-step scaling.
    """
    C = wq.shape[0]
    scale = 1.0 / (C ** 0.5)
    return jnp.concatenate([wq * scale, wk, wv], axis=1).astype(jnp.bfloat16)


def _attend(qkv, T, H):
    """Causal attention for one batch element.

    qkv: (T, 3H) bf16 with layout [q | k | v], 1/sqrt(n_embed) already folded into q.
    Returns (T, H) f32.
    """
    q = qkv[:, 0 * H:1 * H]
    k = qkv[:, 1 * H:2 * H]
    v = qkv[:, 2 * H:3 * H]

    # wei = q @ k^T without materializing k.T (contract last dims of both operands).
    wei = jax.lax.dot_general(
        q, k, dimension_numbers=(((1,), (1,)), ((), ())),
        preferred_element_type=jnp.float32)                       # (T, T) f32

    # Causal mask: col > row -> large negative (diagonal always unmasked -> softmax safe).
    col = jax.lax.broadcasted_iota(jnp.int32, (T, T), 1)
    row = jax.lax.broadcasted_iota(jnp.int32, (T, 1), 0)
    wei = jnp.where(col <= row, wei, -1e30)

    # Numerically stable row-wise softmax in f32; approximate reciprocal on the EUP.
    m = jnp.max(wei, axis=-1, keepdims=True)
    e = jnp.exp(wei - m)
    p = e * pl.reciprocal(jnp.sum(e, axis=-1, keepdims=True), approx=True)

    # TODO(synk): nn.Dropout(0.2) on the attention matrix is identity in eval mode;
    # training-mode stochastic drop is not reproduced here.

    return jnp.dot(p.astype(jnp.bfloat16), v, preferred_element_type=jnp.float32)


# ----------------------------------------------------------------------------- kernels

def head_kernel_batched(x_ref, wqkv_ref, o_ref):
    """Collapsed-batch kernel: single grid step, all B processed at once.

    x_ref: (B, T, C); wqkv_ref: (C, 3H) bf16; o_ref: (B, T, H).
    """
    B, T, C = x_ref.shape
    H = o_ref.shape[2]

    # One fused projection over M = B*T rows (fills the MXU M dimension).
    x = x_ref[...].astype(jnp.bfloat16).reshape(B * T, C)
    qkv = jnp.dot(x, wqkv_ref[...],
                  preferred_element_type=jnp.float32).astype(jnp.bfloat16)  # (B*T, 3H)

    for b in range(B):  # B is tiny and static -> cheap unroll
        o_ref[b] = _attend(qkv[b * T:(b + 1) * T], T, H).astype(o_ref.dtype)


def head_kernel_pergrid(x_ref, wqkv_ref, o_ref):
    """Per-batch kernel for grid=(B,) "parallel" (multi-TensorCore chips, e.g. v7x).

    x_ref: (1, T, C); wqkv_ref: (C, 3H) bf16; o_ref: (1, T, H).
    """
    T, C = x_ref.shape[1], x_ref.shape[2]
    H = o_ref.shape[2]

    x = x_ref[0].astype(jnp.bfloat16)                                       # (T, C)
    qkv = jnp.dot(x, wqkv_ref[...],
                  preferred_element_type=jnp.float32).astype(jnp.bfloat16)  # (T, 3H)
    o_ref[0] = _attend(qkv, T, H).astype(o_ref.dtype)


# ----------------------------------------------------------------------------- wrapper

def _tensorcores_per_chip():
    """Best-effort TensorCore-per-chip count; falls back to 1 (collapsed-batch path)."""
    try:
        dev = jax.devices()[0]
        for attr in ("num_cores", "num_cores_per_chip", "core_count"):
            n = getattr(dev, attr, None)
            if isinstance(n, int) and n > 0:
                return n
    except Exception:
        pass
    return 1


def head_forward(x, wqkv_bf16, *, parallel_batch=None):
    """x: (B, T, C); wqkv_bf16: (C, 3H) bf16 from make_wqkv -> (B, T, H) in x.dtype."""
    B, T, C = x.shape
    H = wqkv_bf16.shape[1] // 3
    if parallel_batch is None:
        # Single-TC chips (v5e/v6e): collapse the batch into one grid step.
        # Multi-TC chips (v7x): keep grid=(B,) parallel so both cores get work.
        parallel_batch = _tensorcores_per_chip() > 1

    if not parallel_batch:
        return pl.pallas_call(
            head_kernel_batched,
            out_shape=jax.ShapeDtypeStruct((B, T, H), x.dtype),
        )(x, wqkv_bf16)

    return pl.pallas_call(
        head_kernel_pergrid,
        out_shape=jax.ShapeDtypeStruct((B, T, H), x.dtype),
        grid=(B,),
        in_specs=[
            pl.BlockSpec((1, T, C), lambda b: (b, 0, 0)),
            pl.BlockSpec((C, 3 * H), lambda b: (0, 0)),
        ],
        out_specs=pl.BlockSpec((1, T, H), lambda b: (b, 0, 0)),
        compiler_params=pltpu.CompilerParams(dimension_semantics=("parallel",)),
    )(x, wqkv_bf16)


# --------------------------------------------------------------------------- references

def head_reference_f32(x, wk, wq, wv):
    """Pure-f32 JAX reference of the PyTorch forward (eval mode)."""
    B, T, C = x.shape
    q = x @ wq
    k = x @ wk
    v = x @ wv
    wei = jnp.einsum('btd,bsd->bts', q, k) / (C ** 0.5)
    mask = jnp.tril(jnp.ones((T, T), dtype=bool))
    wei = jnp.where(mask, wei, -jnp.inf)
    wei = jax.nn.softmax(wei, axis=-1)
    return jnp.einsum('bts,bsd->btd', wei, v)


def head_reference_bf16(x, wqkv_bf16, H):
    """Reference that mirrors the kernel's bf16 MXU operand path (exact softmax)."""
    xb = x.astype(jnp.bfloat16)
    qkv = jnp.einsum('btc,cn->btn', xb, wqkv_bf16,
                     preferred_element_type=jnp.float32).astype(jnp.bfloat16)
    q, k, v = qkv[..., :H], qkv[..., H:2 * H], qkv[..., 2 * H:]
    wei = jnp.einsum('btd,bsd->bts', q, k, preferred_element_type=jnp.float32)
    T = x.shape[1]
    mask = jnp.tril(jnp.ones((T, T), dtype=bool))
    wei = jnp.where(mask, wei, -jnp.inf)
    p = jax.nn.softmax(wei, axis=-1)
    return jnp.einsum('bts,bsd->btd', p.astype(jnp.bfloat16), v,
                      preferred_element_type=jnp.float32)


# --------------------------------------------------------------------------------- main

if __name__ == "__main__":
    key = jax.random.PRNGKey(0)
    kx, kk, kq, kv = jax.random.split(key, 4)

    B, T, C, H = 2, 128, N_EMBED, HEAD_SIZE
    assert T <= BLOCK_SIZE

    x = jax.random.normal(kx, (B, T, C), dtype=jnp.float32)

    # nn.Linear(n_embed, head_size, bias=False) default init: U(-1/sqrt(C), 1/sqrt(C)).
    bound = 1.0 / (C ** 0.5)
    wk = jax.random.uniform(kk, (C, H), jnp.float32, -bound, bound)
    wq = jax.random.uniform(kq, (C, H), jnp.float32, -bound, bound)
    wv = jax.random.uniform(kv, (C, H), jnp.float32, -bound, bound)

    # Built once (module init), stored bf16 with the score scale folded into q columns.
    wqkv = make_wqkv(wq, wk, wv)

    ref_bf16 = head_reference_bf16(x, wqkv, H)
    ref_f32 = head_reference_f32(x, wk, wq, wv)

    # Exercise both launch shapes so either auto-selected path is verified.
    for parallel in (False, True):
        out = head_forward(x, wqkv, parallel_batch=parallel)
        out = jax.block_until_ready(out)
        assert out.shape == (B, T, H)
        # Tight check against a reference matching the kernel's bf16 operand path...
        assert jnp.allclose(out, ref_bf16, atol=5e-3, rtol=5e-3), \
            f"mismatch vs bf16-matched reference (parallel_batch={parallel})"
        # ...and a loose check against the pure-f32 reference (absorbs bf16 rounding).
        assert jnp.allclose(out, ref_f32, atol=3e-2, rtol=3e-2), \
            f"mismatch vs f32 reference (parallel_batch={parallel})"

    print("KERNEL_OK")
</pallas_src>

<mosaic_0001>
module attributes {stable_mosaic.version = 11 : i64} {
  func.func @head_kernel_batched(%arg0: memref<2x128x384xf32, #tpu.memory_space<vmem>>, %arg1: memref<384x192xbf16, #tpu.memory_space<vmem>>, %arg2: memref<2x128x64xf32, #tpu.memory_space<vmem>>) attributes {dimension_semantics = [], scalar_prefetch = 0 : i64, scratch_operands = 0 : i64, tpu.core_type = #tpu.core_type<tc>} {
    %c0 = arith.constant 0 : index
    %c0_0 = arith.constant 0 : index
    %c0_1 = arith.constant 0 : index
    %0 = vector.load %arg0[%c0, %c0_0, %c0_1] : memref<2x128x384xf32, #tpu.memory_space<vmem>>, vector<2x128x384xf32>
    %1 = arith.truncf %0 : vector<2x128x384xf32> to vector<2x128x384xbf16>
    %2 = vector.shape_cast %1 : vector<2x128x384xbf16> to vector<256x384xbf16>
    %c0_2 = arith.constant 0 : index
    %c0_3 = arith.constant 0 : index
    %3 = vector.load %arg1[%c0_2, %c0_3] : memref<384x192xbf16, #tpu.memory_space<vmem>>, vector<384x192xbf16>
    %cst = arith.constant dense<0.000000e+00> : vector<256x192xf32>
    %4 = tpu.matmul %2, %3, %cst {dimension_numbers = #tpu.dot_dimension_numbers<[1], [0], [0], [1], [0, 0, 1, 1], [], []>} : vector<256x384xbf16>, vector<384x192xbf16>, vector<256x192xf32> -> vector<256x192xf32>
    %5 = arith.truncf %4 : vector<256x192xf32> to vector<256x192xbf16>
    %6 = vector.extract_strided_slice %5 {offsets = [0, 0], sizes = [128, 192], strides = [1, 1]} : vector<256x192xbf16> to vector<128x192xbf16>
    %7 = vector.extract_strided_slice %6 {offsets = [0, 0], sizes = [128, 64], strides = [1, 1]} : vector<128x192xbf16> to vector<128x64xbf16>
    %8 = vector.extract_strided_slice %6 {offsets = [0, 64], sizes = [128, 64], strides = [1, 1]} : vector<128x192xbf16> to vector<128x64xbf16>
    %9 = vector.extract_strided_slice %6 {offsets = [0, 128], sizes = [128, 64], strides = [1, 1]} : vector<128x192xbf16> to vector<128x64xbf16>
    %cst_4 = arith.constant dense<0.000000e+00> : vector<128x128xf32>
    %10 = tpu.matmul %7, %8, %cst_4 {dimension_numbers = #tpu.dot_dimension_numbers<[1], [1], [0], [0], [0, 0, 1, 0], [], []>} : vector<128x64xbf16>, vector<128x64xbf16>, vector<128x128xf32> -> vector<128x128xf32>
    %11 = tpu.iota {dimensions = array<i32: 1>} : vector<128x128xi32>
    %12 = tpu.iota {dimensions = array<i32: 0>} : vector<128x1xi32>
    %13 = vector.broadcast %12 : vector<128x1xi32> to vector<128x128xi32>
    %14 = arith.cmpi sle, %11, %13 : vector<128x128xi32>
    %cst_5 = arith.constant -1.000000e+30 : f32
    %15 = vector.broadcast %cst_5 : f32 to vector<128x128xf32>
    %16 = arith.select %14, %10, %15 : vector<128x128xi1>, vector<128x128xf32>
    %cst_6 = arith.constant dense<0xFF800000> : vector<128xf32>
    %17 = vector.multi_reduction <maximumf>, %16, %cst_6 [1] : vector<128x128xf32> to vector<128xf32>
    %18 = vector.shape_cast %17 : vector<128xf32> to vector<128x1xf32>
    %19 = vector.broadcast %18 : vector<128x1xf32> to vector<128x128xf32>
    %20 = arith.subf %16, %19 : vector<128x128xf32>
    %21 = math.exp %20 : vector<128x128xf32>
    %cst_7 = arith.constant dense<0.000000e+00> : vector<128xf32>
    %22 = vector.multi_reduction <add>, %21, %cst_7 [1] : vector<128x128xf32> to vector<128xf32>
    %23 = vector.shape_cast %22 : vector<128xf32> to vector<128x1xf32>
    %24 = tpu.reciprocal %23 {approx = true} : vector<128x1xf32> -> vector<128x1xf32>
    %25 = vector.broadcast %24 : vector<128x1xf32> to vector<128x128xf32>
    %26 = arith.mulf %21, %25 : vector<128x128xf32>
    %27 = arith.truncf %26 : vector<128x128xf32> to vector<128x128xbf16>
    %cst_8 = arith.constant dense<0.000000e+00> : vector<128x64xf32>
    %28 = tpu.matmul %27, %9, %cst_8 {dimension_numbers = #tpu.dot_dimension_numbers<[1], [0], [0], [1], [0, 0, 1, 1], [], []>} : vector<128x128xbf16>, vector<128x64xbf16>, vector<128x64xf32> -> vector<128x64xf32>
    %c0_9 = arith.constant 0 : index
    %c0_10 = arith.constant 0 : index
    %c0_11 = arith.constant 0 : index
    %29 = vector.load %arg2[%c0_9, %c0_10, %c0_11] : memref<2x128x64xf32, #tpu.memory_space<vmem>>, vector<1x128x64xf32>
    %30 = vector.shape_cast %29 : vector<1x128x64xf32> to vector<128x64xf32>
    %31 = vector.shape_cast %28 : vector<128x64xf32> to vector<1x128x64xf32>
    tpu.vector_store %arg2[%c0_9, %c0_10, %c0_11], %31 {strides = array<i32>} : memref<2x128x64xf32, #tpu.memory_space<vmem>>, vector<1x128x64xf32>,
    %32 = vector.extract_strided_slice %5 {offsets = [128, 0], sizes = [128, 192], strides = [1, 1]} : vector<256x192xbf16> to vector<128x192xbf16>
    %33 = vector.extract_strided_slice %32 {offsets = [0, 0], sizes = [128, 64], strides = [1, 1]} : vector<128x192xbf16> to vector<128x64xbf16>
    %34 = vector.extract_strided_slice %32 {offsets = [0, 64], sizes = [128, 64], strides = [1, 1]} : vector<128x192xbf16> to vector<128x64xbf16>
    %35 = vector.extract_strided_slice %32 {offsets = [0, 128], sizes = [128, 64], strides = [1, 1]} : vector<128x192xbf16> to vector<128x64xbf16>
    %cst_12 = arith.constant dense<0.000000e+00> : vector<128x128xf32>
    %36 = tpu.matmul %33, %34, %cst_12 {dimension_numbers = #tpu.dot_dimension_numbers<[1], [1], [0], [0], [0, 0, 1, 0], [], []>} : vector<128x64xbf16>, vector<128x64xbf16>, vector<128x128xf32> -> vector<128x128xf32>
    %37 = tpu.iota {dimensions = array<i32: 1>} : vector<128x128xi32>
    %38 = tpu.iota {dimensions = array<i32: 0>} : vector<128x1xi32>
    %39 = vector.broadcast %38 : vector<128x1xi32> to vector<128x128xi32>
    %40 = arith.cmpi sle, %37, %39 : vector<128x128xi32>
    %cst_13 = arith.constant -1.000000e+30 : f32
    %41 = vector.broadcast %cst_13 : f32 to vector<128x128xf32>
    %42 = arith.select %40, %36, %41 : vector<128x128xi1>, vector<128x128xf32>
    %cst_14 = arith.constant dense<0xFF800000> : vector<128xf32>
    %43 = vector.multi_reduction <maximumf>, %42, %cst_14 [1] : vector<128x128xf32> to vector<128xf32>
    %44 = vector.shape_cast %43 : vector<128xf32> to vector<128x1xf32>
    %45 = vector.broadcast %44 : vector<128x1xf32> to vector<128x128xf32>
    %46 = arith.subf %42, %45 : vector<128x128xf32>
    %47 = math.exp %46 : vector<128x128xf32>
    %cst_15 = arith.constant dense<0.000000e+00> : vector<128xf32>
    %48 = vector.multi_reduction <add>, %47, %cst_15 [1] : vector<128x128xf32> to vector<128xf32>
    %49 = vector.shape_cast %48 : vector<128xf32> to vector<128x1xf32>
    %50 = tpu.reciprocal %49 {approx = true} : vector<128x1xf32> -> vector<128x1xf32>
    %51 = vector.broadcast %50 : vector<128x1xf32> to vector<128x128xf32>
    %52 = arith.mulf %47, %51 : vector<128x128xf32>
    %53 = arith.truncf %52 : vector<128x128xf32> to vector<128x128xbf16>
    %cst_16 = arith.constant dense<0.000000e+00> : vector<128x64xf32>
    %54 = tpu.matmul %53, %35, %cst_16 {dimension_numbers = #tpu.dot_dimension_numbers<[1], [0], [0], [1], [0, 0, 1, 1], [], []>} : vector<128x128xbf16>, vector<128x64xbf16>, vector<128x64xf32> -> vector<128x64xf32>
    %c1 = arith.constant 1 : index
    %c0_17 = arith.constant 0 : index
    %c0_18 = arith.constant 0 : index
    %55 = vector.load %arg2[%c1, %c0_17, %c0_18] : memref<2x128x64xf32, #tpu.memory_space<vmem>>, vector<1x128x64xf32>
    %56 = vector.shape_cast %55 : vector<1x128x64xf32> to vector<128x64xf32>
    %57 = vector.shape_cast %54 : vector<128x64xf32> to vector<1x128x64xf32>
    tpu.vector_store %arg2[%c1, %c0_17, %c0_18], %57 {strides = array<i32>} : memref<2x128x64xf32, #tpu.memory_space<vmem>>, vector<1x128x64xf32>,
    return
  }
}

</mosaic_0001>

<llo_original>
// kernel: tpu_custom_call.1
$region0: #{tpu_custom_call.1}
  #allocation0 [shape = 'u32[]', space=smem, size = 0x4, offset = 0x4, fixed_abs, tag = 'smem constant byte address 0x4 - core index']
  #allocation1 [shape = 'u32[144,128]{1,0:T(1,128)}', space=vmem, size = 0x12000, scoped, tag = 'internal scratch']
  %s0 = inlined_call_operand.hbm [shape: f32[2,128,384], index: 0, kind: input, shape index: {}]
  %s1 = inlined_call_operand.vmem [shape: bf16[384,192], index: 1, kind: input, shape index: {}]
  %s2 = inlined_call_operand.vmem [shape: f32[2,128,64], index: 2, kind: output, shape index: {}]
  %s3 = sld [smem:[#allocation0]]
  $region22: #{tpu_custom_call.1} parent=0
    _
  %s5 = ssub.s32 1, %s3
  %s6 = scalar_select 0, %s5, %s3
  $region1: #{tpu_custom_call.1} parent=0
    #allocation2 [shape = 'u8[393216]{0}', space=vmem, size = 0x60000, scoped, tag = 'input window, operand 0, single buffered']
    #allocation3 [shape = 's32[1]{0}', space=sflag, size = 0x4, scoped, tag = 'scoped memory for tpu_custom_call.1']
    %7 = vsyncpa [#allocation3], 0
    // Predicated region
    $region2: #{tpu_custom_call.1} parent=1 // pred_check
      _
    $region3: #{tpu_custom_call.1} parent=1 // pred_check_branch
      %9 = sbr.rel (0) target = $region5
    $region4: #{tpu_custom_call.1} parent=1 // pred_region
      %s11 = ssub.s32 12288, 12288
      %12 = vsyncadd [#allocation3], %s11
      %s13 = sshll.u32 [#allocation2], 4
      %s14 = int_to_ptr.vmem [resolvable:$true] %s13
      %19 = dma.hbm_to_vmem [thread:$0]  %s0, 12288, %s14, [#allocation3], 384, 384, 24
    $region5: #{tpu_custom_call.1} parent=1 // pred_fallthru
      _
    // Predicated region
    $region6: #{tpu_custom_call.1} parent=1 // pred_check
      _
    $region7: #{tpu_custom_call.1} parent=1 // pred_check_branch
      %21 = sbr.rel (0) target = $region9
    $region8: #{tpu_custom_call.1} parent=1 // pred_region
      _
    $region9: #{tpu_custom_call.1} parent=1 // pred_fallthru
      _
    // Predicated region
    $region10: #{tpu_custom_call.1} parent=1 // pred_check
      _
    $region11: #{tpu_custom_call.1} parent=1 // pred_check_branch
      %23 = sbr.rel (0) target = $region13
    $region12: #{tpu_custom_call.1} parent=1 // pred_region
      %24 = dma.done [#allocation3], 12288
    $region13: #{tpu_custom_call.1} parent=1 // pred_fallthru
      _
    %v26 = vld [vmem:[#allocation2] sm:$0xff]
    %v27 = vld [vmem:[#allocation2 + $0x8] sm:$0xff]
    %v28 = vld [vmem:[#allocation2 + $0x10] sm:$0xff]
    %v29 = vld [vmem:[#allocation2 + $0x18] sm:$0xff]
    %v30 = vld [vmem:[#allocation2 + $0x20] sm:$0xff]
    %v31 = vld [vmem:[#allocation2 + $0x28] sm:$0xff]
    %v32 = vld [vmem:[#allocation2 + $0x30] sm:$0xff]
    %v33 = vld [vmem:[#allocation2 + $0x38] sm:$0xff]
    %v34 = vld [vmem:[#allocation2 + $0x40] sm:$0xff]
    %v35 = vld [vmem:[#allocation2 + $0x48] sm:$0xff]
    %v36 = vld [vmem:[#allocation2 + $0x50] sm:$0xff]
    %v37 = vld [vmem:[#allocation2 + $0x58] sm:$0xff]
    %v38 = vld [vmem:[#allocation2 + $0x60] sm:$0xff]
    %v39 = vld [vmem:[#allocation2 + $0x68] sm:$0xff]
    %v40 = vld [vmem:[#allocation2 + $0x70] sm:$0xff]
    %v41 = vld [vmem:[#allocation2 + $0x78] sm:$0xff]
    %v42 = vld [vmem:[#allocation2 + $0x80] sm:$0xff]
    %v43 = vld [vmem:[#allocation2 + $0x88] sm:$0xff]
    %v44 = vld [vmem:[#allocation2 + $0x90] sm:$0xff]
    %v45 = vld [vmem:[#allocation2 + $0x98] sm:$0xff]
    %v46 = vld [vmem:[#allocation2 + $0xa0] sm:$0xff]
    %v47 = vld [vmem:[#allocation2 + $0xa8] sm:$0xff]
    %v48 = vld [vmem:[#allocation2 + $0xb0] sm:$0xff]
    %v49 = vld [vmem:[#allocation2 + $0xb8] sm:$0xff]
    %v50 = vld [vmem:[#allocation2 + $0xc0] sm:$0xff]
    %v51 = vld [vmem:[#allocation2 + $0xc8] sm:$0xff]
    %v52 = vld [vmem:[#allocation2 + $0xd0] sm:$0xff]
    %v53 = vld [vmem:[#allocation2 + $0xd8] sm:$0xff]
    %v54 = vld [vmem:[#allocation2 + $0xe0] sm:$0xff]
    %v55 = vld [vmem:[#allocation2 + $0xe8] sm:$0xff]
    %v56 = vld [vmem:[#allocation2 + $0xf0] sm:$0xff]
    %v57 = vld [vmem:[#allocation2 + $0xf8] sm:$0xff]
    %v58 = vld [vmem:[#allocation2 + $0x100] sm:$0xff]
    %v59 = vld [vmem:[#allocation2 + $0x108] sm:$0xff]
    %v60 = vld [vmem:[#allocation2 + $0x110] sm:$0xff]
    %v61 = vld [vmem:[#allocation2 + $0x118] sm:$0xff]
    %v62 = vld [vmem:[#allocation2 + $0x120] sm:$0xff]
    %v63 = vld [vmem:[#allocation2 + $0x128] sm:$0xff]
    %v64 = vld [vmem:[#allocation2 + $0x130] sm:$0xff]
    %v65 = vld [vmem:[#allocation2 + $0x138] sm:$0xff]
    %v66 = vld [vmem:[#allocation2 + $0x140] sm:$0xff]
    %v67 = vld [vmem:[#allocation2 + $0x148] sm:$0xff]
    %v68 = vld [vmem:[#allocation2 + $0x150] sm:$0xff]
    %v69 = vld [vmem:[#allocation2 + $0x158] sm:$0xff]
    %v70 = vld [vmem:[#allocation2 + $0x160] sm:$0xff]
    %v71 = vld [vmem:[#allocation2 + $0x168] sm:$0xff]
    %v72 = vld [vmem:[#allocation2 + $0x170] sm:$0xff]
    %v73 = vld [vmem:[#allocation2 + $0x178] sm:$0xff]
    %v74 = vld [vmem:[#allocation2 + $0x180] sm:$0xff]
    %v75 = vld [vmem:[#allocation2 + $0x188] sm:$0xff]
    %v76 = vld [vmem:[#allocation2 + $0x190] sm:$0xff]
    %v77 = vld [vmem:[#allocation2 + $0x198] sm:$0xff]
    %v78 = vld [vmem:[#allocation2 + $0x1a0] sm:$0xff]
    %v79 = vld [vmem:[#allocation2 + $0x1a8] sm:$0xff]
    %v80 = vld [vmem:[#allocation2 + $0x1b0] sm:$0xff]
    %v81 = vld [vmem:[#allocation2 + $0x1b8] sm:$0xff]
    %v82 = vld [vmem:[#allocation2 + $0x1c0] sm:$0xff]
    %v83 = vld [vmem:[#allocation2 + $0x1c8] sm:$0xff]
    %v84 = vld [vmem:[#allocation2 + $0x1d0] sm:$0xff]
    %v85 = vld [vmem:[#allocation2 + $0x1d8] sm:$0xff]
    %v86 = vld [vmem:[#allocation2 + $0x1e0] sm:$0xff]
    %v87 = vld [vmem:[#allocation2 + $0x1e8] sm:$0xff]
    %v88 = vld [vmem:[#allocation2 + $0x1f0] sm:$0xff]
    %v89 = vld [vmem:[#allocation2 + $0x1f8] sm:$0xff]
    %v90 = vld [vmem:[#allocation2 + $0x200] sm:$0xff]
    %v91 = vld [vmem:[#allocation2 + $0x208] sm:$0xff]
    %v92 = vld [vmem:[#allocation2 + $0x210] sm:$0xff]
    %v93 = vld [vmem:[#allocation2 + $0x218] sm:$0xff]
    %v94 = vld [vmem:[#allocation2 + $0x220] sm:$0xff]
    %v95 = vld [vmem:[#allocation2 + $0x228] sm:$0xff]
    %v96 = vld [vmem:[#allocation2 + $0x230] sm:$0xff]
    %v97 = vld [vmem:[#allocation2 + $0x238] sm:$0xff]
    %v98 = vld [vmem:[#allocation2 + $0x240] sm:$0xff]
    %v99 = vld [vmem:[#allocation2 + $0x248] sm:$0xff]
    %v100 = vld [vmem:[#allocation2 + $0x250] sm:$0xff]
    %v101 = vld [vmem:[#allocation2 + $0x258] sm:$0xff]
    %v102 = vld [vmem:[#allocation2 + $0x260] sm:$0xff]
    %v103 = vld [vmem:[#allocation2 + $0x268] sm:$0xff]
    %v104 = vld [vmem:[#allocation2 + $0x270] sm:$0xff]
    %v105 = vld [vmem:[#allocation2 + $0x278] sm:$0xff]
    %v106 = vld [vmem:[#allocation2 + $0x280] sm:$0xff]
    %v107 = vld [vmem:[#allocation2 + $0x288] sm:$0xff]
    %v108 = vld [vmem:[#allocation2 + $0x290] sm:$0xff]
    %v109 = vld [vmem:[#allocation2 + $0x298] sm:$0xff]
    %v110 = vld [vmem:[#allocation2 + $0x2a0] sm:$0xff]
    %v111 = vld [vmem:[#allocation2 + $0x2a8] sm:$0xff]
    %v112 = vld [vmem:[#allocation2 + $0x2b0] sm:$0xff]
    %v113 = vld [vmem:[#allocation2 + $0x2b8] sm:$0xff]
    %v114 = vld [vmem:[#allocation2 + $0x2c0] sm:$0xff]
    %v115 = vld [vmem:[#allocation2 + $0x2c8] sm:$0xff]
    %v116 = vld [vmem:[#allocation2 + $0x2d0] sm:$0xff]
    %v117 = vld [vmem:[#allocation2 + $0x2d8] sm:$0xff]
    %v118 = vld [vmem:[#allocation2 + $0x2e0] sm:$0xff]
    %v119 = vld [vmem:[#allocation2 + $0x2e8] sm:$0xff]
    %v120 = vld [vmem:[#allocation2 + $0x2f0] sm:$0xff]
    %v121 = vld [vmem:[#allocation2 + $0x2f8] sm:$0xff]
    %v122 = vpack.c.bf16 %v29, %v26
    %v123 = vpack.c.bf16 %v30, %v27
    %v124 = vpack.c.bf16 %v31, %v28
    %v125 = vpack.c.bf16 %v35, %v32
    %v126 = vpack.c.bf16 %v36, %v33
    %v127 = vpack.c.bf16 %v37, %v34
    %v128 = vpack.c.bf16 %v41, %v38
    %v129 = vpack.c.bf16 %v42, %v39
    %v130 = vpack.c.bf16 %v43, %v40
    %v131 = vpack.c.bf16 %v47, %v44
    %v132 = vpack.c.bf16 %v48, %v45
    %v133 = vpack.c.bf16 %v49, %v46
    %v134 = vpack.c.bf16 %v53, %v50
    %v135 = vpack.c.bf16 %v54, %v51
    %v136 = vpack.c.bf16 %v55, %v52
    %v137 = vpack.c.bf16 %v59, %v56
    %v138 = vpack.c.bf16 %v60, %v57
    %v139 = vpack.c.bf16 %v61, %v58
    %v140 = vpack.c.bf16 %v65, %v62
    %v141 = vpack.c.bf16 %v66, %v63
    %v142 = vpack.c.bf16 %v67, %v64
    %v143 = vpack.c.bf16 %v71, %v68
    %v144 = vpack.c.bf16 %v72, %v69
    %v145 = vpack.c.bf16 %v73, %v70
    %v146 = vpack.c.bf16 %v77, %v74
    %v147 = vpack.c.bf16 %v78, %v75
    %v148 = vpack.c.bf16 %v79, %v76
    %v149 = vpack.c.bf16 %v83, %v80
    %v150 = vpack.c.bf16 %v84, %v81
    %v151 = vpack.c.bf16 %v85, %v82
    %v152 = vpack.c.bf16 %v89, %v86
    %v153 = vpack.c.bf16 %v90, %v87
    %v154 = vpack.c.bf16 %v91, %v88
    %v155 = vpack.c.bf16 %v95, %v92
    %v156 = vpack.c.bf16 %v96, %v93
    %v157 = vpack.c.bf16 %v97, %v94
    %v158 = vpack.c.bf16 %v101, %v98
    %v159 = vpack.c.bf16 %v102, %v99
    %v160 = vpack.c.bf16 %v103, %v100
    %v161 = vpack.c.bf16 %v107, %v104
    %v162 = vpack.c.bf16 %v108, %v105
    %v163 = vpack.c.bf16 %v109, %v106
    %v164 = vpack.c.bf16 %v113, %v110
    %v165 = vpack.c.bf16 %v114, %v111
    %v166 = vpack.c.bf16 %v115, %v112
    %v167 = vpack.c.bf16 %v119, %v116
    %v168 = vpack.c.bf16 %v120, %v117
    %v169 = vpack.c.bf16 %v121, %v118
    %v170 = vld [vmem:[%s1] sm:$0xff]
    %v171 = vld [vmem:[%s1 + $0x8] sm:$0xff]
    %v172 = vld [vmem:[%s1 + $0x10] sm:$0xff]
    %v173 = vld [vmem:[%s1 + $0x18] sm:$0xff]
    %v174 = vld [vmem:[%s1 + $0x20] sm:$0xff]
    %v175 = vld [vmem:[%s1 + $0x28] sm:$0xff]
    %v176 = vld [vmem:[%s1 + $0x30] sm:$0xff]
    %v177 = vld [vmem:[%s1 + $0x38] sm:$0xff]
    %v178 = vld [vmem:[%s1 + $0x40] sm:$0xff]
    %v179 = vld [vmem:[%s1 + $0x48] sm:$0xff]
    %v180 = vld [vmem:[%s1 + $0x50] sm:$0xff]
    %v181 = vld [vmem:[%s1 + $0x58] sm:$0xff]
    %v182 = vld [vmem:[%s1 + $0x60] sm:$0xff]
    %v183 = vld [vmem:[%s1 + $0x68] sm:$0xff]
    %v184 = vld [vmem:[%s1 + $0x70] sm:$0xff]
    %v185 = vld [vmem:[%s1 + $0x78] sm:$0xff]
    %v186 = vld [vmem:[%s1 + $0x80] sm:$0xff]
    %v187 = vld [vmem:[%s1 + $0x88] sm:$0xff]
    %v188 = vld [vmem:[%s1 + $0x90] sm:$0xff]
    %v189 = vld [vmem:[%s1 + $0x98] sm:$0xff]
    %v190 = vld [vmem:[%s1 + $0xa0] sm:$0xff]
    %v191 = vld [vmem:[%s1 + $0xa8] sm:$0xff]
    %v192 = vld [vmem:[%s1 + $0xb0] sm:$0xff]
    %v193 = vld [vmem:[%s1 + $0xb8] sm:$0xff]
    %v194 = vld [vmem:[%s1 + $0xc0] sm:$0xff]
    %v195 = vld [vmem:[%s1 + $0xc8] sm:$0xff]
    %v196 = vld [vmem:[%s1 + $0xd0] sm:$0xff]
    %v197 = vld [vmem:[%s1 + $0xd8] sm:$0xff]
    %v198 = vld [vmem:[%s1 + $0xe0] sm:$0xff]
    %v199 = vld [vmem:[%s1 + $0xe8] sm:$0xff]
    %v200 = vld [vmem:[%s1 + $0xf0] sm:$0xff]
    %v201 = vld [vmem:[%s1 + $0xf8] sm:$0xff]
    %v202 = vld [vmem:[%s1 + $0x100] sm:$0xff]
    %v203 = vld [vmem:[%s1 + $0x108] sm:$0xff]
    %v204 = vld [vmem:[%s1 + $0x110] sm:$0xff]
    %v205 = vld [vmem:[%s1 + $0x118] sm:$0xff]
    %v206 = vld [vmem:[%s1 + $0x120] sm:$0xff]
    %v207 = vld [vmem:[%s1 + $0x128] sm:$0xff]
    %v208 = vld [vmem:[%s1 + $0x130] sm:$0xff]
    %v209 = vld [vmem:[%s1 + $0x138] sm:$0xff]
    %v210 = vld [vmem:[%s1 + $0x140] sm:$0xff]
    %v211 = vld [vmem:[%s1 + $0x148] sm:$0xff]
    %v212 = vld [vmem:[%s1 + $0x150] sm:$0xff]
    %v213 = vld [vmem:[%s1 + $0x158] sm:$0xff]
    %v214 = vld [vmem:[%s1 + $0x160] sm:$0xff]
    %v215 = vld [vmem:[%s1 + $0x168] sm:$0xff]
    %v216 = vld [vmem:[%s1 + $0x170] sm:$0xff]
    %v217 = vld [vmem:[%s1 + $0x178] sm:$0xff]
    %v266 = vunpack.c.l.b16 %v170
    %v267 = vunpack.c.h.b16 %v170
    %v268 = vunpack.c.l.b16 %v171
    %v269 = vunpack.c.h.b16 %v171
    %v270 = vunpack.c.l.b16 %v172
    %v271 = vunpack.c.h.b16 %v172
    %v272 = vunpack.c.l.b16 %v173
    %v273 = vunpack.c.h.b16 %v173
    %v274 = vunpack.c.l.b16 %v174
    %v275 = vunpack.c.h.b16 %v174
    %v276 = vunpack.c.l.b16 %v175
    %v277 = vunpack.c.h.b16 %v175
    %v278 = vunpack.c.l.b16 %v176
    %v279 = vunpack.c.h.b16 %v176
    %v280 = vunpack.c.l.b16 %v177
    %v281 = vunpack.c.h.b16 %v177
    %v282 = vunpack.c.l.b16 %v178
    %v283 = vunpack.c.h.b16 %v178
    %v284 = vunpack.c.l.b16 %v179
    %v285 = vunpack.c.h.b16 %v179
    %v286 = vunpack.c.l.b16 %v180
    %v287 = vunpack.c.h.b16 %v180
    %v288 = vunpack.c.l.b16 %v181
    %v289 = vunpack.c.h.b16 %v181
    %v290 = vunpack.c.l.b16 %v182
    %v291 = vunpack.c.h.b16 %v182
    %v292 = vunpack.c.l.b16 %v183
    %v293 = vunpack.c.h.b16 %v183
    %v294 = vunpack.c.l.b16 %v184
    %v295 = vunpack.c.h.b16 %v184
    %v296 = vunpack.c.l.b16 %v185
    %v297 = vunpack.c.h.b16 %v185
    %v298 = vunpack.c.l.b16 %v186
    %v299 = vunpack.c.h.b16 %v186
    %v300 = vunpack.c.l.b16 %v187
    %v301 = vunpack.c.h.b16 %v187
    %v302 = vunpack.c.l.b16 %v188
    %v303 = vunpack.c.h.b16 %v188
    %v304 = vunpack.c.l.b16 %v189
    %v305 = vunpack.c.h.b16 %v189
    %v306 = vunpack.c.l.b16 %v190
    %v307 = vunpack.c.h.b16 %v190
    %v308 = vunpack.c.l.b16 %v191
    %v309 = vunpack.c.h.b16 %v191
    %v310 = vunpack.c.l.b16 %v192
    %v311 = vunpack.c.h.b16 %v192
    %v312 = vunpack.c.l.b16 %v193
    %v313 = vunpack.c.h.b16 %v193
    %v314 = vunpack.c.l.b16 %v194
    %v315 = vunpack.c.h.b16 %v194
    %v316 = vunpack.c.l.b16 %v195
    %v317 = vunpack.c.h.b16 %v195
    %v318 = vunpack.c.l.b16 %v196
    %v319 = vunpack.c.h.b16 %v196
    %v320 = vunpack.c.l.b16 %v197
    %v321 = vunpack.c.h.b16 %v197
    %v322 = vunpack.c.l.b16 %v198
    %v323 = vunpack.c.h.b16 %v198
    %v324 = vunpack.c.l.b16 %v199
    %v325 = vunpack.c.h.b16 %v199
    %v326 = vunpack.c.l.b16 %v200
    %v327 = vunpack.c.h.b16 %v200
    %v328 = vunpack.c.l.b16 %v201
    %v329 = vunpack.c.h.b16 %v201
    %v330 = vunpack.c.l.b16 %v202
    %v331 = vunpack.c.h.b16 %v202
    %v332 = vunpack.c.l.b16 %v203
    %v333 = vunpack.c.h.b16 %v203
    %v334 = vunpack.c.l.b16 %v204
    %v335 = vunpack.c.h.b16 %v204
    %v336 = vunpack.c.l.b16 %v205
    %v337 = vunpack.c.h.b16 %v205
    %v338 = vunpack.c.l.b16 %v206
    %v339 = vunpack.c.h.b16 %v206
    %v340 = vunpack.c.l.b16 %v207
    %v341 = vunpack.c.h.b16 %v207
    %v342 = vunpack.c.l.b16 %v208
    %v343 = vunpack.c.h.b16 %v208
    %v344 = vunpack.c.l.b16 %v209
    %v345 = vunpack.c.h.b16 %v209
    %v346 = vunpack.c.l.b16 %v210
    %v347 = vunpack.c.h.b16 %v210
    %v348 = vunpack.c.l.b16 %v211
    %v349 = vunpack.c.h.b16 %v211
    %v350 = vunpack.c.l.b16 %v212
    %v351 = vunpack.c.h.b16 %v212
    %v352 = vunpack.c.l.b16 %v213
    %v353 = vunpack.c.h.b16 %v213
    %v354 = vunpack.c.l.b16 %v214
    %v355 = vunpack.c.h.b16 %v214
    %v356 = vunpack.c.l.b16 %v215
    %v357 = vunpack.c.h.b16 %v215
    %v358 = vunpack.c.l.b16 %v216
    %v359 = vunpack.c.h.b16 %v216
    %v360 = vunpack.c.l.b16 %v217
    %v361 = vunpack.c.h.b16 %v217
    %v362 = vpack.c.b16 %v268, %v266
    %v363 = vpack.c.b16 %v269, %v267
    %v364 = vpack.c.b16 %v272, %v270
    %v365 = vpack.c.b16 %v273, %v271
    %v366 = vpack.c.b16 %v276, %v274
    %v367 = vpack.c.b16 %v277, %v275
    %v368 = vpack.c.b16 %v280, %v278
    %v369 = vpack.c.b16 %v281, %v279
    %v370 = vpack.c.b16 %v284, %v282
    %v371 = vpack.c.b16 %v285, %v283
    %v372 = vpack.c.b16 %v288, %v286
    %v373 = vpack.c.b16 %v289, %v287
    %v374 = vpack.c.b16 %v292, %v290
    %v375 = vpack.c.b16 %v293, %v291
    %v376 = vpack.c.b16 %v296, %v294
    %v377 = vpack.c.b16 %v297, %v295
    %v378 = vpack.c.b16 %v300, %v298
    %v379 = vpack.c.b16 %v301, %v299
    %v380 = vpack.c.b16 %v304, %v302
    %v381 = vpack.c.b16 %v305, %v303
    %v382 = vpack.c.b16 %v308, %v306
    %v383 = vpack.c.b16 %v309, %v307
    %v384 = vpack.c.b16 %v312, %v310
    %v385 = vpack.c.b16 %v313, %v311
    %v386 = vpack.c.b16 %v316, %v314
    %v387 = vpack.c.b16 %v317, %v315
    %v388 = vpack.c.b16 %v320, %v318
    %v389 = vpack.c.b16 %v321, %v319
    %v390 = vpack.c.b16 %v324, %v322
    %v391 = vpack.c.b16 %v325, %v323
    %v392 = vpack.c.b16 %v328, %v326
    %v393 = vpack.c.b16 %v329, %v327
    %v394 = vpack.c.b16 %v332, %v330
    %v395 = vpack.c.b16 %v333, %v331
    %v396 = vpack.c.b16 %v336, %v334
    %v397 = vpack.c.b16 %v337, %v335
    %v398 = vpack.c.b16 %v340, %v338
    %v399 = vpack.c.b16 %v341, %v339
    %v400 = vpack.c.b16 %v344, %v342
    %v401 = vpack.c.b16 %v345, %v343
    %v402 = vpack.c.b16 %v348, %v346
    %v403 = vpack.c.b16 %v349, %v347
    %v404 = vpack.c.b16 %v352, %v350
    %v405 = vpack.c.b16 %v353, %v351
    %v406 = vpack.c.b16 %v356, %v354
    %v407 = vpack.c.b16 %v357, %v355
    %v408 = vpack.c.b16 %v360, %v358
    %v409 = vpack.c.b16 %v361, %v359
    %458 = vmatprep.subr.bf16.mxu0 %v363
    %459 = vmatpush1.bf16.msra.mxu0 %v362
    %460 = vmatprep.subr.bf16.mxu0 %v365
    %461 = vmatpush1.bf16.msra.mxu0 %v364
    %462 = vmatprep.subr.bf16.mxu0 %v367
    %463 = vmatpush1.bf16.msra.mxu0 %v366
    %464 = vmatprep.subr.bf16.mxu0 %v369
    %465 = vmatpush1.bf16.msra.mxu0 %v368
    %466 = vmatprep.subr.bf16.mxu0 %v371
    %467 = vmatpush1.bf16.msra.mxu0 %v370
    %468 = vmatprep.subr.bf16.mxu0 %v373
    %469 = vmatpush1.bf16.msra.mxu0 %v372
    %470 = vmatprep.subr.bf16.mxu0 %v375
    %471 = vmatpush1.bf16.msra.mxu0 %v374
    %472 = vmatprep.subr.bf16.mxu0 %v377
    %473 = vmatpush1.bf16.msra.mxu0 %v376
    %474 = vmatprep.subr.bf16.mxu0 %v379
    %475 = vmatpush1.bf16.msra.mxu0 %v378
    %476 = vmatprep.subr.bf16.mxu0 %v381
    %477 = vmatpush1.bf16.msra.mxu0 %v380
    %478 = vmatprep.subr.bf16.mxu0 %v383
    %479 = vmatpush1.bf16.msra.mxu0 %v382
    %480 = vmatprep.subr.bf16.mxu0 %v385
    %481 = vmatpush1.bf16.msra.mxu0 %v384
    %482 = vmatprep.subr.bf16.mxu0 %v387
    %483 = vmatpush1.bf16.msra.mxu0 %v386
    %484 = vmatprep.subr.bf16.mxu0 %v389
    %485 = vmatpush1.bf16.msra.mxu0 %v388
    %486 = vmatprep.subr.bf16.mxu0 %v391
    %487 = vmatpush1.bf16.msra.mxu0 %v390
    %488 = vmatprep.subr.bf16.mxu0 %v393
    %489 = vmatpush1.bf16.msra.mxu0 %v392
    %490 = vmatprep.mubr.bf16.mxu0 %v123
    %491 = vmatmul.mubr.bf16.gmra.mrb[0].mxu0 %v122
    %v492 = vpop.f32.mrb[0].mxu0
    %v493 = vadd.f32 0.0, %v492
    %v494 = vpop.f32.mrb[0].mxu0
    %v495 = vadd.f32 0.0, %v494
    %v496 = vpop.f32.mrb[0].mxu0
    %v497 = vadd.f32 0.0, %v496
    %v498 = vpop.f32.mrb[0].mxu0
    %v499 = vadd.f32 0.0, %v498
    %500 = vmatprep.mubr.bf16.mxu0 %v126
    %501 = vmatmul.mubr.bf16.gmra.mrb[0].mxu0 %v125
    %v502 = vpop.f32.mrb[0].mxu0
    %v503 = vadd.f32 0.0, %v502
    %v504 = vpop.f32.mrb[0].mxu0
    %v505 = vadd.f32 0.0, %v504
    %v506 = vpop.f32.mrb[0].mxu0
    %v507 = vadd.f32 0.0, %v506
    %v508 = vpop.f32.mrb[0].mxu0
    %v509 = vadd.f32 0.0, %v508
    %510 = vmatprep.mubr.bf16.mxu0 %v129
    %511 = vmatmul.mubr.bf16.gmra.mrb[0].mxu0 %v128
    %v512 = vpop.f32.mrb[0].mxu0
    %v513 = vadd.f32 0.0, %v512
    %v514 = vpop.f32.mrb[0].mxu0
    %v515 = vadd.f32 0.0, %v514
    %v516 = vpop.f32.mrb[0].mxu0
    %v517 = vadd.f32 0.0, %v516
    %v518 = vpop.f32.mrb[0].mxu0
    %v519 = vadd.f32 0.0, %v518
    %520 = vmatprep.mubr.bf16.mxu0 %v132
    %521 = vmatmul.mubr.bf16.gmra.mrb[0].mxu0 %v131
    %v522 = vpop.f32.mrb[0].mxu0
    %v523 = vadd.f32 0.0, %v522
    %v524 = vpop.f32.mrb[0].mxu0
    %v525 = vadd.f32 0.0, %v524
    %v526 = vpop.f32.mrb[0].mxu0
    %v527 = vadd.f32 0.0, %v526
    %v528 = vpop.f32.mrb[0].mxu0
    %v529 = vadd.f32 0.0, %v528
    %530 = vmatprep.mubr.bf16.mxu0 %v135
    %531 = vmatmul.mubr.bf16.gmra.mrb[0].mxu0 %v134
    %v532 = vpop.f32.mrb[0].mxu0
    %v533 = vadd.f32 0.0, %v532
    %v534 = vpop.f32.mrb[0].mxu0
    %v535 = vadd.f32 0.0, %v534
    %v536 = vpop.f32.mrb[0].mxu0
    %v537 = vadd.f32 0.0, %v536
    %v538 = vpop.f32.mrb[0].mxu0
    %v539 = vadd.f32 0.0, %v538
    %540 = vmatprep.mubr.bf16.mxu0 %v138
    %541 = vmatmul.mubr.bf16.gmra.mrb[0].mxu0 %v137
    %v542 = vpop.f32.mrb[0].mxu0
    %v543 = vadd.f32 0.0, %v542
    %v544 = vpop.f32.mrb[0].mxu0
    %v545 = vadd.f32 0.0, %v544
    %v546 = vpop.f32.mrb[0].mxu0
    %v547 = vadd.f32 0.0, %v546
    %v548 = vpop.f32.mrb[0].mxu0
    %v549 = vadd.f32 0.0, %v548
    %550 = vmatprep.mubr.bf16.mxu0 %v141
    %551 = vmatmul.mubr.bf16.gmra.mrb[0].mxu0 %v140
    %v552 = vpop.f32.mrb[0].mxu0
    %v553 = vadd.f32 0.0, %v552
    %v554 = vpop.f32.mrb[0].mxu0
    %v555 = vadd.f32 0.0, %v554
    %v556 = vpop.f32.mrb[0].mxu0
    %v557 = vadd.f32 0.0, %v556
    %v558 = vpop.f32.mrb[0].mxu0
    %v559 = vadd.f32 0.0, %v558
    %560 = vmatprep.mubr.bf16.mxu0 %v144
    %561 = vmatmul.mubr.bf16.gmra.mrb[0].mxu0 %v143
    %v562 = vpop.f32.mrb[0].mxu0
    %v563 = vadd.f32 0.0, %v562
    %v564 = vpop.f32.mrb[0].mxu0
    %v565 = vadd.f32 0.0, %v564
    %v566 = vpop.f32.mrb[0].mxu0
    %v567 = vadd.f32 0.0, %v566
    %v568 = vpop.f32.mrb[0].mxu0
    %v569 = vadd.f32 0.0, %v568
    %570 = vmatprep.mubr.bf16.mxu0 %v147
    %571 = vmatmul.mubr.bf16.gmra.mrb[0].mxu0 %v146
    %v572 = vpop.f32.mrb[0].mxu0
    %v573 = vadd.f32 0.0, %v572
    %v574 = vpop.f32.mrb[0].mxu0
    %v575 = vadd.f32 0.0, %v574
    %v576 = vpop.f32.mrb[0].mxu0
    %v577 = vadd.f32 0.0, %v576
    %v578 = vpop.f32.mrb[0].mxu0
    %v579 = vadd.f32 0.0, %v578
    %580 = vmatprep.mubr.bf16.mxu0 %v150
    %581 = vmatmul.mubr.bf16.gmra.mrb[0].mxu0 %v149
    %v582 = vpop.f32.mrb[0].mxu0
    %v583 = vadd.f32 0.0, %v582
    %v584 = vpop.f32.mrb[0].mxu0
    %v585 = vadd.f32 0.0, %v584
    %v586 = vpop.f32.mrb[0].mxu0
    %v587 = vadd.f32 0.0, %v586
    %v588 = vpop.f32.mrb[0].mxu0
    %v589 = vadd.f32 0.0, %v588
    %590 = vmatprep.mubr.bf16.mxu0 %v153
    %591 = vmatmul.mubr.bf16.gmra.mrb[0].mxu0 %v152
    %v592 = vpop.f32.mrb[0].mxu0
    %v593 = vadd.f32 0.0, %v592
    %v594 = vpop.f32.mrb[0].mxu0
    %v595 = vadd.f32 0.0, %v594
    %v596 = vpop.f32.mrb[0].mxu0
    %v597 = vadd.f32 0.0, %v596
    %v598 = vpop.f32.mrb[0].mxu0
    %v599 = vadd.f32 0.0, %v598
    %600 = vmatprep.mubr.bf16.mxu0 %v156
    %601 = vmatmul.mubr.bf16.gmra.mrb[0].mxu0 %v155
    %v602 = vpop.f32.mrb[0].mxu0
    %v603 = vadd.f32 0.0, %v602
    %v604 = vpop.f32.mrb[0].mxu0
    %v605 = vadd.f32 0.0, %v604
    %v606 = vpop.f32.mrb[0].mxu0
    %v607 = vadd.f32 0.0, %v606
    %v608 = vpop.f32.mrb[0].mxu0
    %v609 = vadd.f32 0.0, %v608
    %610 = vmatprep.mubr.bf16.mxu0 %v159
    %611 = vmatmul.mubr.bf16.gmra.mrb[0].mxu0 %v158
    %v612 = vpop.f32.mrb[0].mxu0
    %v613 = vadd.f32 0.0, %v612
    %v614 = vpop.f32.mrb[0].mxu0
    %v615 = vadd.f32 0.0, %v614
    %v616 = vpop.f32.mrb[0].mxu0
    %v617 = vadd.f32 0.0, %v616
    %v618 = vpop.f32.mrb[0].mxu0
    %v619 = vadd.f32 0.0, %v618
    %620 = vmatprep.mubr.bf16.mxu0 %v162
    %621 = vmatmul.mubr.bf16.gmra.mrb[0].mxu0 %v161
    %v622 = vpop.f32.mrb[0].mxu0
    %v623 = vadd.f32 0.0, %v622
    %v624 = vpop.f32.mrb[0].mxu0
    %v625 = vadd.f32 0.0, %v624
    %v626 = vpop.f32.mrb[0].mxu0
    %v627 = vadd.f32 0.0, %v626
    %v628 = vpop.f32.mrb[0].mxu0
    %v629 = vadd.f32 0.0, %v628
    %630 = vmatprep.mubr.bf16.mxu0 %v165
    %631 = vmatmul.mubr.bf16.gmra.mrb[0].mxu0 %v164
    %v632 = vpop.f32.mrb[0].mxu0
    %v633 = vadd.f32 0.0, %v632
    %v634 = vpop.f32.mrb[0].mxu0
    %v635 = vadd.f32 0.0, %v634
    %v636 = vpop.f32.mrb[0].mxu0
    %v637 = vadd.f32 0.0, %v636
    %v638 = vpop.f32.mrb[0].mxu0
    %v639 = vadd.f32 0.0, %v638
    %640 = vmatprep.mubr.bf16.mxu0 %v168
    %641 = vmatmul.mubr.bf16.gmra.mrb[0].mxu0 %v167
    %v642 = vpop.f32.mrb[0].mxu0
    %v643 = vadd.f32 0.0, %v642
    %v644 = vpop.f32.mrb[0].mxu0
    %v645 = vadd.f32 0.0, %v644
    %v646 = vpop.f32.mrb[0].mxu0
    %v647 = vadd.f32 0.0, %v646
    %v648 = vpop.f32.mrb[0].mxu0
    %v649 = vadd.f32 0.0, %v648
    %650 = vdwg.mxu0
    %651 = vmatprep.subr.bf16.mxu0 %v395
    %652 = vmatpush1.bf16.msra.mxu0 %v394
    %653 = vmatprep.subr.bf16.mxu0 %v397
    %654 = vmatpush1.bf16.msra.mxu0 %v396
    %655 = vmatprep.subr.bf16.mxu0 %v399
    %656 = vmatpush1.bf16.msra.mxu0 %v398
    %657 = vmatprep.subr.bf16.mxu0 %v401
    %658 = vmatpush1.bf16.msra.mxu0 %v400
    %659 = vmatprep.subr.bf16.mxu0 %v403
    %660 = vmatpush1.bf16.msra.mxu0 %v402
    %661 = vmatprep.subr.bf16.mxu0 %v405
    %662 = vmatpush1.bf16.msra.mxu0 %v404
    %663 = vmatprep.subr.bf16.mxu0 %v407
    %664 = vmatpush1.bf16.msra.mxu0 %v406
    %665 = vmatprep.subr.bf16.mxu0 %v409
    %666 = vmatpush1.bf16.msra.mxu0 %v408
    %667 = vmatprep.subr.bf16.mxu0 0
    %668 = vmatpush1.bf16.msra.mxu0 0
    %669 = vmatprep.subr.bf16.mxu0 0
    %670 = vmatpush1.bf16.msra.mxu0 0
    %671 = vmatprep.subr.bf16.mxu0 0
    %672 = vmatpush1.bf16.msra.mxu0 0
    %673 = vmatprep.subr.bf16.mxu0 0
    %674 = vmatpush1.bf16.msra.mxu0 0
    %675 = vmatprep.subr.bf16.mxu0 0
    %676 = vmatpush1.bf16.msra.mxu0 0
    %677 = vmatprep.subr.bf16.mxu0 0
    %678 = vmatpush1.bf16.msra.mxu0 0
    %679 = vmatprep.subr.bf16.mxu0 0
    %680 = vmatpush1.bf16.msra.mxu0 0
    %681 = vmatprep.subr.bf16.mxu0 0
    %682 = vmatpush1.bf16.msra.mxu0 0
    %683 = vmatprep.mubr.bf16.mxu0 0
    %684 = vmatmul.mubr.bf16.gmra.mrb[0].mxu0 %v124
    %v685 = vpop.f32.mrb[0].mxu0
    %v686 = vadd.f32 %v493, %v685
    %v687 = vpop.f32.mrb[0].mxu0
    %v688 = vadd.f32 %v495, %v687
    %v689 = vpop.f32.mrb[0].mxu0
    %v690 = vadd.f32 %v497, %v689
    %v691 = vpop.f32.mrb[0].mxu0
    %v692 = vadd.f32 %v499, %v691
    %693 = vmatprep.mubr.bf16.mxu0 0
    %694 = vmatmul.mubr.bf16.gmra.mrb[0].mxu0 %v127
    %v695 = vpop.f32.mrb[0].mxu0
    %v696 = vadd.f32 %v503, %v695
    %v697 = vpop.f32.mrb[0].mxu0
    %v698 = vadd.f32 %v505, %v697
    %v699 = vpop.f32.mrb[0].mxu0
    %v700 = vadd.f32 %v507, %v699
    %v701 = vpop.f32.mrb[0].mxu0
    %v702 = vadd.f32 %v509, %v701
    %703 = vmatprep.mubr.bf16.mxu0 0
    %704 = vmatmul.mubr.bf16.gmra.mrb[0].mxu0 %v130
    %v705 = vpop.f32.mrb[0].mxu0
    %v706 = vadd.f32 %v513, %v705
    %v707 = vpop.f32.mrb[0].mxu0
    %v708 = vadd.f32 %v515, %v707
    %v709 = vpop.f32.mrb[0].mxu0
    %v710 = vadd.f32 %v517, %v709
    %v711 = vpop.f32.mrb[0].mxu0
    %v712 = vadd.f32 %v519, %v711
    %713 = vmatprep.mubr.bf16.mxu0 0
    %714 = vmatmul.mubr.bf16.gmra.mrb[0].mxu0 %v133
    %v715 = vpop.f32.mrb[0].mxu0
    %v716 = vadd.f32 %v523, %v715
    %v717 = vpop.f32.mrb[0].mxu0
    %v718 = vadd.f32 %v525, %v717
    %v719 = vpop.f32.mrb[0].mxu0
    %v720 = vadd.f32 %v527, %v719
    %v721 = vpop.f32.mrb[0].mxu0
    %v722 = vadd.f32 %v529, %v721
    %723 = vmatprep.mubr.bf16.mxu0 0
    %724 = vmatmul.mubr.bf16.gmra.mrb[0].mxu0 %v136
    %v725 = vpop.f32.mrb[0].mxu0
    %v726 = vadd.f32 %v533, %v725
    %v727 = vpop.f32.mrb[0].mxu0
    %v728 = vadd.f32 %v535, %v727
    %v729 = vpop.f32.mrb[0].mxu0
    %v730 = vadd.f32 %v537, %v729
    %v731 = vpop.f32.mrb[0].mxu0
    %v732 = vadd.f32 %v539, %v731
    %733 = vmatprep.mubr.bf16.mxu0 0
    %734 = vmatmul.mubr.bf16.gmra.mrb[0].mxu0 %v139
    %v735 = vpop.f32.mrb[0].mxu0
    %v736 = vadd.f32 %v543, %v735
    %v737 = vpop.f32.mrb[0].mxu0
    %v738 = vadd.f32 %v545, %v737
    %v739 = vpop.f32.mrb[0].mxu0
    %v740 = vadd.f32 %v547, %v739
    %v741 = vpop.f32.mrb[0].mxu0
    %v742 = vadd.f32 %v549, %v741
    %743 = vmatprep.mubr.bf16.mxu0 0
    %744 = vmatmul.mubr.bf16.gmra.mrb[0].mxu0 %v142
    %v745 = vpop.f32.mrb[0].mxu0
    %v746 = vadd.f32 %v553, %v745
    %v747 = vpop.f32.mrb[0].mxu0
    %v748 = vadd.f32 %v555, %v747
    %v749 = vpop.f32.mrb[0].mxu0
    %v750 = vadd.f32 %v557, %v749
    %v751 = vpop.f32.mrb[0].mxu0
    %v752 = vadd.f32 %v559, %v751
    %753 = vmatprep.mubr.bf16.mxu0 0
    %754 = vmatmul.mubr.bf16.gmra.mrb[0].mxu0 %v145
    %v755 = vpop.f32.mrb[0].mxu0
    %v756 = vadd.f32 %v563, %v755
    %v757 = vpop.f32.mrb[0].mxu0
    %v758 = vadd.f32 %v565, %v757
    %v759 = vpop.f32.mrb[0].mxu0
    %v760 = vadd.f32 %v567, %v759
    %v761 = vpop.f32.mrb[0].mxu0
    %v762 = vadd.f32 %v569, %v761
    %763 = vmatprep.mubr.bf16.mxu0 0
    %764 = vmatmul.mubr.bf16.gmra.mrb[0].mxu0 %v148
    %v765 = vpop.f32.mrb[0].mxu0
    %v766 = vadd.f32 %v573, %v765
    %v767 = vpop.f32.mrb[0].mxu0
    %v768 = vadd.f32 %v575, %v767
    %v769 = vpop.f32.mrb[0].mxu0
    %v770 = vadd.f32 %v577, %v769
    %v771 = vpop.f32.mrb[0].mxu0
    %v772 = vadd.f32 %v579, %v771
    %773 = vmatprep.mubr.bf16.mxu0 0
    %774 = vmatmul.mubr.bf16.gmra.mrb[0].mxu0 %v151
    %v775 = vpop.f32.mrb[0].mxu0
    %v776 = vadd.f32 %v583, %v775
    %v777 = vpop.f32.mrb[0].mxu0
    %v778 = vadd.f32 %v585, %v777
    %v779 = vpop.f32.mrb[0].mxu0
    %v780 = vadd.f32 %v587, %v779
    %v781 = vpop.f32.mrb[0].mxu0
    %v782 = vadd.f32 %v589, %v781
    %783 = vmatprep.mubr.bf16.mxu0 0
    %784 = vmatmul.mubr.bf16.gmra.mrb[0].mxu0 %v154
    %v785 = vpop.f32.mrb[0].mxu0
    %v786 = vadd.f32 %v593, %v785
    %v787 = vpop.f32.mrb[0].mxu0
    %v788 = vadd.f32 %v595, %v787
    %v789 = vpop.f32.mrb[0].mxu0
    %v790 = vadd.f32 %v597, %v789
    %v791 = vpop.f32.mrb[0].mxu0
    %v792 = vadd.f32 %v599, %v791
    %793 = vmatprep.mubr.bf16.mxu0 0
    %794 = vmatmul.mubr.bf16.gmra.mrb[0].mxu0 %v157
    %v795 = vpop.f32.mrb[0].mxu0
    %v796 = vadd.f32 %v603, %v795
    %v797 = vpop.f32.mrb[0].mxu0
    %v798 = vadd.f32 %v605, %v797
    %v799 = vpop.f32.mrb[0].mxu0
    %v800 = vadd.f32 %v607, %v799
    %v801 = vpop.f32.mrb[0].mxu0
    %v802 = vadd.f32 %v609, %v801
    %803 = vmatprep.mubr.bf16.mxu0 0
    %804 = vmatmul.mubr.bf16.gmra.mrb[0].mxu0 %v160
    %v805 = vpop.f32.mrb[0].mxu0
    %v806 = vadd.f32 %v613, %v805
    %v807 = vpop.f32.mrb[0].mxu0
    %v808 = vadd.f32 %v615, %v807
    %v809 = vpop.f32.mrb[0].mxu0
    %v810 = vadd.f32 %v617, %v809
    %v811 = vpop.f32.mrb[0].mxu0
    %v812 = vadd.f32 %v619, %v811
    %813 = vmatprep.mubr.bf16.mxu0 0
    %814 = vmatmul.mubr.bf16.gmra.mrb[0].mxu0 %v163
    %v815 = vpop.f32.mrb[0].mxu0
    %v816 = vadd.f32 %v623, %v815
    %v817 = vpop.f32.mrb[0].mxu0
    %v818 = vadd.f32 %v625, %v817
    %v819 = vpop.f32.mrb[0].mxu0
    %v820 = vadd.f32 %v627, %v819
    %v821 = vpop.f32.mrb[0].mxu0
    %v822 = vadd.f32 %v629, %v821
    %823 = vmatprep.mubr.bf16.mxu0 0
    %824 = vmatmul.mubr.bf16.gmra.mrb[0].mxu0 %v166
    %v825 = vpop.f32.mrb[0].mxu0
    %v826 = vadd.f32 %v633, %v825
    %v827 = vpop.f32.mrb[0].mxu0
    %v828 = vadd.f32 %v635, %v827
    %v829 = vpop.f32.mrb[0].mxu0
    %v830 = vadd.f32 %v637, %v829
    %v831 = vpop.f32.mrb[0].mxu0
    %v832 = vadd.f32 %v639, %v831
    %833 = vmatprep.mubr.bf16.mxu0 0
    %834 = vmatmul.mubr.bf16.gmra.mrb[0].mxu0 %v169
    %v835 = vpop.f32.mrb[0].mxu0
    %v836 = vadd.f32 %v643, %v835
    %v837 = vpop.f32.mrb[0].mxu0
    %v838 = vadd.f32 %v645, %v837
    %v839 = vpop.f32.mrb[0].mxu0
    %v840 = vadd.f32 %v647, %v839
    %v841 = vpop.f32.mrb[0].mxu0
    %v842 = vadd.f32 %v649, %v841
    %843 = vdwg.mxu0
    %v844 = vpack.c.bf16 %v690, %v686
    %v845 = vpack.c.bf16 %v692, %v688
    %v846 = vpack.c.bf16 %v700, %v696
    %v847 = vpack.c.bf16 %v702, %v698
    %v848 = vpack.c.bf16 %v710, %v706
    %v849 = vpack.c.bf16 %v712, %v708
    %v850 = vpack.c.bf16 %v720, %v716
    %v851 = vpack.c.bf16 %v722, %v718
    %v852 = vpack.c.bf16 %v730, %v726
    %v853 = vpack.c.bf16 %v732, %v728
    %v854 = vpack.c.bf16 %v740, %v736
    %v855 = vpack.c.bf16 %v742, %v738
    %v856 = vpack.c.bf16 %v750, %v746
    %v857 = vpack.c.bf16 %v752, %v748
    %v858 = vpack.c.bf16 %v760, %v756
    %v859 = vpack.c.bf16 %v762, %v758
    %v860 = vpack.c.bf16 %v770, %v766
    %v861 = vpack.c.bf16 %v772, %v768
    %v862 = vpack.c.bf16 %v780, %v776
    %v863 = vpack.c.bf16 %v782, %v778
    %v864 = vpack.c.bf16 %v790, %v786
    %v865 = vpack.c.bf16 %v792, %v788
    %v866 = vpack.c.bf16 %v800, %v796
    %v867 = vpack.c.bf16 %v802, %v798
    %v868 = vpack.c.bf16 %v810, %v806
    %v869 = vpack.c.bf16 %v812, %v808
    %v870 = vpack.c.bf16 %v820, %v816
    %v871 = vpack.c.bf16 %v822, %v818
    %v872 = vpack.c.bf16 %v830, %v826
    %v873 = vpack.c.bf16 %v832, %v828
    %v874 = vpack.c.bf16 %v840, %v836
    %v875 = vpack.c.bf16 %v842, %v838
    %884 = vrot.lane.b32.xlu0 %v844, 64
    %v885 = vpop.permute.xlu0 %884
    %886 = vrot.lane.b32.xlu0 %v846, 64
    %v887 = vpop.permute.xlu0 %886
    %888 = vrot.lane.b32.xlu0 %v848, 64
    %v889 = vpop.permute.xlu0 %888
    %890 = vrot.lane.b32.xlu0 %v850, 64
    %v891 = vpop.permute.xlu0 %890
    %892 = vrot.lane.b32.xlu0 %v852, 64
    %v893 = vpop.permute.xlu0 %892
    %894 = vrot.lane.b32.xlu0 %v854, 64
    %v895 = vpop.permute.xlu0 %894
    %896 = vrot.lane.b32.xlu0 %v856, 64
    %v897 = vpop.permute.xlu0 %896
    %898 = vrot.lane.b32.xlu0 %v858, 64
    %v899 = vpop.permute.xlu0 %898
    %vm900 = vcmask 523264
    %v902 = vsel %vm900, %v844, 0
    %v905 = vsel %vm900, %v846, 0
    %v908 = vsel %vm900, %v848, 0
    %v911 = vsel %vm900, %v850, 0
    %v914 = vsel %vm900, %v852, 0
    %v917 = vsel %vm900, %v854, 0
    %v920 = vsel %vm900, %v856, 0
    %v923 = vsel %vm900, %v858, 0
    %v926 = vsel %vm900, %v885, 0
    %v929 = vsel %vm900, %v887, 0
    %v932 = vsel %vm900, %v889, 0
    %v935 = vsel %vm900, %v891, 0
    %v938 = vsel %vm900, %v893, 0
    %v941 = vsel %vm900, %v895, 0
    %v944 = vsel %vm900, %v897, 0
    %v947 = vsel %vm900, %v899, 0
    %949 = vmatprep.subr.bf16.mxu0 0
    %950 = vmatpush1.bf16.xpose.msra.mxu0 %v926
    %951 = vmatprep.subr.bf16.mxu0 0
    %952 = vmatpush1.bf16.xpose.msra.mxu0 %v929
    %953 = vmatprep.subr.bf16.mxu0 0
    %954 = vmatpush1.bf16.xpose.msra.mxu0 %v932
    %955 = vmatprep.subr.bf16.mxu0 0
    %956 = vmatpush1.bf16.xpose.msra.mxu0 %v935
    %957 = vmatprep.subr.bf16.mxu0 0
    %958 = vmatpush1.bf16.xpose.msra.mxu0 %v938
    %959 = vmatprep.subr.bf16.mxu0 0
    %960 = vmatpush1.bf16.xpose.msra.mxu0 %v941
    %961 = vmatprep.subr.bf16.mxu0 0
    %962 = vmatpush1.bf16.xpose.msra.mxu0 %v944
    %963 = vmatprep.subr.bf16.mxu0 0
    %964 = vmatpush1.bf16.xpose.msra.mxu0 %v947
    %965 = vmatprep.subr.bf16.mxu0 0
    %966 = vmatpush1.bf16.xpose.msra.mxu0 0
    %967 = vmatprep.subr.bf16.mxu0 0
    %968 = vmatpush1.bf16.xpose.msra.mxu0 0
    %969 = vmatprep.subr.bf16.mxu0 0
    %970 = vmatpush1.bf16.xpose.msra.mxu0 0
    %971 = vmatprep.subr.bf16.mxu0 0
    %972 = vmatpush1.bf16.xpose.msra.mxu0 0
    %973 = vmatprep.subr.bf16.mxu0 0
    %974 = vmatpush1.bf16.xpose.msra.mxu0 0
    %975 = vmatprep.subr.bf16.mxu0 0
    %976 = vmatpush1.bf16.xpose.msra.mxu0 0
    %977 = vmatprep.subr.bf16.mxu0 0
    %978 = vmatpush1.bf16.xpose.msra.mxu0 0
    %979 = vmatprep.subr.bf16.mxu0 0
    %980 = vmatpush1.bf16.xpose.msra.mxu0 0
    %981 = vmatprep.mubr.bf16.mxu0 0
    %982 = vmatmul.mubr.bf16.gmra.mrb[0].mxu0 %v902
    %v983 = vpop.f32.mrb[0].mxu0
    %v984 = vadd.f32 0.0, %v983
    %v985 = vpop.f32.mrb[0].mxu0
    %v986 = vpop.f32.mrb[0].mxu0
    %v987 = vadd.f32 0.0, %v986
    %v988 = vpop.f32.mrb[0].mxu0
    %989 = vmatprep.mubr.bf16.mxu0 0
    %990 = vmatmul.mubr.bf16.gmra.mrb[0].mxu0 %v905
    %v991 = vpop.f32.mrb[0].mxu0
    %v992 = vadd.f32 0.0, %v991
    %v993 = vpop.f32.mrb[0].mxu0
    %v994 = vpop.f32.mrb[0].mxu0
    %v995 = vadd.f32 0.0, %v994
    %v996 = vpop.f32.mrb[0].mxu0
    %997 = vmatprep.mubr.bf16.mxu0 0
    %998 = vmatmul.mubr.bf16.gmra.mrb[0].mxu0 %v908
    %v999 = vpop.f32.mrb[0].mxu0
    %v1000 = vadd.f32 0.0, %v999
    %v1001 = vpop.f32.mrb[0].mxu0
    %v1002 = vpop.f32.mrb[0].mxu0
    %v1003 = vadd.f32 0.0, %v1002
    %v1004 = vpop.f32.mrb[0].mxu0
    %1005 = vmatprep.mubr.bf16.mxu0 0
    %1006 = vmatmul.mubr.bf16.gmra.mrb[0].mxu0 %v911
    %v1007 = vpop.f32.mrb[0].mxu0
    %v1008 = vadd.f32 0.0, %v1007
    %v1009 = vpop.f32.mrb[0].mxu0
    %v1010 = vpop.f32.mrb[0].mxu0
    %v1011 = vadd.f32 0.0, %v1010
    %v1012 = vpop.f32.mrb[0].mxu0
    %1013 = vmatprep.mubr.bf16.mxu0 0
    %1014 = vmatmul.mubr.bf16.gmra.mrb[0].mxu0 %v914
    %v1015 = vpop.f32.mrb[0].mxu0
    %v1016 = vadd.f32 0.0, %v1015
    %v1017 = vpop.f32.mrb[0].mxu0
    %v1018 = vpop.f32.mrb[0].mxu0
    %v1019 = vadd.f32 0.0, %v1018
    %v1020 = vpop.f32.mrb[0].mxu0
    %1021 = vmatprep.mubr.bf16.mxu0 0
    %1022 = vmatmul.mubr.bf16.gmra.mrb[0].mxu0 %v917
    %v1023 = vpop.f32.mrb[0].mxu0
    %v1024 = vadd.f32 0.0, %v1023
    %v1025 = vpop.f32.mrb[0].mxu0
    %v1026 = vpop.f32.mrb[0].mxu0
    %v1027 = vadd.f32 0.0, %v1026
    %v1028 = vpop.f32.mrb[0].mxu0
    %1029 = vmatprep.mubr.bf16.mxu0 0
    %1030 = vmatmul.mubr.bf16.gmra.mrb[0].mxu0 %v920
    %v1031 = vpop.f32.mrb[0].mxu0
    %v1032 = vadd.f32 0.0, %v1031
    %v1033 = vpop.f32.mrb[0].mxu0
    %v1034 = vpop.f32.mrb[0].mxu0
    %v1035 = vadd.f32 0.0, %v1034
    %v1036 = vpop.f32.mrb[0].mxu0
    %1037 = vmatprep.mubr.bf16.mxu0 0
    %1038 = vmatmul.mubr.bf16.gmra.mrb[0].mxu0 %v923
    %v1039 = vpop.f32.mrb[0].mxu0
    %v1040 = vadd.f32 0.0, %v1039
    %v1041 = vpop.f32.mrb[0].mxu0
    %v1042 = vpop.f32.mrb[0].mxu0
    %v1043 = vadd.f32 0.0, %v1042
    %v1044 = vpop.f32.mrb[0].mxu0
    %1045 = vdwg.mxu0
    %v1046 = vlaneseq
    %v1047 = vand.u32 %v1046, 127
    %v1048 = vlaneseq
    %v1049 = vshrl.u32 %v1048, 7
    %v1050 = vadd.s32 %v1049, 8
    %v1051 = vadd.s32 %v1049, 16
    %v1052 = vadd.s32 %v1049, 24
    %v1053 = vadd.s32 %v1049, 32
    %v1054 = vadd.s32 %v1049, 40
    %v1055 = vadd.s32 %v1049, 48
    %v1056 = vadd.s32 %v1049, 56
    %v1057 = vadd.s32 %v1049, 64
    %v1058 = vadd.s32 %v1049, 72
    %v1059 = vadd.s32 %v1049, 80
    %v1060 = vadd.s32 %v1049, 88
    %v1061 = vadd.s32 %v1049, 96
    %v1062 = vadd.s32 %v1049, 104
    %v1063 = vadd.s32 %v1049, 112
    %v1064 = vadd.s32 %v1049, 120
    %vm1065 = vcmp.le.s32.totalorder %v1047, %v1049
    %vm1066 = vcmp.le.s32.totalorder %v1047, %v1050
    %vm1067 = vcmp.le.s32.totalorder %v1047, %v1051
    %vm1068 = vcmp.le.s32.totalorder %v1047, %v1052
    %vm1069 = vcmp.le.s32.totalorder %v1047, %v1053
    %vm1070 = vcmp.le.s32.totalorder %v1047, %v1054
    %vm1071 = vcmp.le.s32.totalorder %v1047, %v1055
    %vm1072 = vcmp.le.s32.totalorder %v1047, %v1056
    %vm1073 = vcmp.le.s32.totalorder %v1047, %v1057
    %vm1074 = vcmp.le.s32.totalorder %v1047, %v1058
    %vm1075 = vcmp.le.s32.totalorder %v1047, %v1059
    %vm1076 = vcmp.le.s32.totalorder %v1047, %v1060
    %vm1077 = vcmp.le.s32.totalorder %v1047, %v1061
    %vm1078 = vcmp.le.s32.totalorder %v1047, %v1062
    %vm1079 = vcmp.le.s32.totalorder %v1047, %v1063
    %vm1080 = vcmp.le.s32.totalorder %v1047, %v1064
    %v1081 = vsel %vm1065, %v984, -1e+30
    %v1082 = vsel %vm1066, %v987, -1e+30
    %v1083 = vsel %vm1067, %v992, -1e+30
    %v1084 = vsel %vm1068, %v995, -1e+30
    %v1085 = vsel %vm1069, %v1000, -1e+30
    %v1086 = vsel %vm1070, %v1003, -1e+30
    %v1087 = vsel %vm1071, %v1008, -1e+30
    %v1088 = vsel %vm1072, %v1011, -1e+30
    %v1089 = vsel %vm1073, %v1016, -1e+30
    %v1090 = vsel %vm1074, %v1019, -1e+30
    %v1091 = vsel %vm1075, %v1024, -1e+30
    %v1092 = vsel %vm1076, %v1027, -1e+30
    %v1093 = vsel %vm1077, %v1032, -1e+30
    %v1094 = vsel %vm1078, %v1035, -1e+30
    %v1095 = vsel %vm1079, %v1040, -1e+30
    %v1096 = vsel %vm1080, %v1043, -1e+30
    %1097 = vmax.xlane.f32.xlu0 %v1081
    %v1098 = vpop.xlane.xlu0 %1097
    %1099 = vmax.xlane.f32.xlu0 %v1082
    %v1100 = vpop.xlane.xlu0 %1099
    %1101 = vmax.xlane.f32.xlu0 %v1083
    %v1102 = vpop.xlane.xlu0 %1101
    %1103 = vmax.xlane.f32.xlu0 %v1084
    %v1104 = vpop.xlane.xlu0 %1103
    %1105 = vmax.xlane.f32.xlu0 %v1085
    %v1106 = vpop.xlane.xlu0 %1105
    %1107 = vmax.xlane.f32.xlu0 %v1086
    %v1108 = vpop.xlane.xlu0 %1107
    %1109 = vmax.xlane.f32.xlu0 %v1087
    %v1110 = vpop.xlane.xlu0 %1109
    %1111 = vmax.xlane.f32.xlu0 %v1088
    %v1112 = vpop.xlane.xlu0 %1111
    %1113 = vmax.xlane.f32.xlu0 %v1089
    %v1114 = vpop.xlane.xlu0 %1113
    %1115 = vmax.xlane.f32.xlu0 %v1090
    %v1116 = vpop.xlane.xlu0 %1115
    %1117 = vmax.xlane.f32.xlu0 %v1091
    %v1118 = vpop.xlane.xlu0 %1117
    %1119 = vmax.xlane.f32.xlu0 %v1092
    %v1120 = vpop.xlane.xlu0 %1119
    %1121 = vmax.xlane.f32.xlu0 %v1093
    %v1122 = vpop.xlane.xlu0 %1121
    %1123 = vmax.xlane.f32.xlu0 %v1094
    %v1124 = vpop.xlane.xlu0 %1123
    %1125 = vmax.xlane.f32.xlu0 %v1095
    %v1126 = vpop.xlane.xlu0 %1125
    %1127 = vmax.xlane.f32.xlu0 %v1096
    %v1128 = vpop.xlane.xlu0 %1127
    %v1129 = vsub.f32 %v1081, %v1098
    %v1130 = vsub.f32 %v1082, %v1100
    %v1131 = vsub.f32 %v1083, %v1102
    %v1132 = vsub.f32 %v1084, %v1104
    %v1133 = vsub.f32 %v1085, %v1106
    %v1134 = vsub.f32 %v1086, %v1108
    %v1135 = vsub.f32 %v1087, %v1110
    %v1136 = vsub.f32 %v1088, %v1112
    %v1137 = vsub.f32 %v1089, %v1114
    %v1138 = vsub.f32 %v1090, %v1116
    %v1139 = vsub.f32 %v1091, %v1118
    %v1140 = vsub.f32 %v1092, %v1120
    %v1141 = vsub.f32 %v1093, %v1122
    %v1142 = vsub.f32 %v1094, %v1124
    %v1143 = vsub.f32 %v1095, %v1126
    %v1144 = vsub.f32 %v1096, %v1128
    %v1145 = vmul.f32 %v1129, 1.442695
    %v1146 = vpow.pop %v1145
    %v1147 = vmul.f32 %v1130, 1.442695
    %v1148 = vpow.pop %v1147
    %v1149 = vmul.f32 %v1131, 1.442695
    %v1150 = vpow.pop %v1149
    %v1151 = vmul.f32 %v1132, 1.442695
    %v1152 = vpow.pop %v1151
    %v1153 = vmul.f32 %v1133, 1.442695
    %v1154 = vpow.pop %v1153
    %v1155 = vmul.f32 %v1134, 1.442695
    %v1156 = vpow.pop %v1155
    %v1157 = vmul.f32 %v1135, 1.442695
    %v1158 = vpow.pop %v1157
    %v1159 = vmul.f32 %v1136, 1.442695
    %v1160 = vpow.pop %v1159
    %v1161 = vmul.f32 %v1137, 1.442695
    %v1162 = vpow.pop %v1161
    %v1163 = vmul.f32 %v1138, 1.442695
    %v1164 = vpow.pop %v1163
    %v1165 = vmul.f32 %v1139, 1.442695
    %v1166 = vpow.pop %v1165
    %v1167 = vmul.f32 %v1140, 1.442695
    %v1168 = vpow.pop %v1167
    %v1169 = vmul.f32 %v1141, 1.442695
    %v1170 = vpow.pop %v1169
    %v1171 = vmul.f32 %v1142, 1.442695
    %v1172 = vpow.pop %v1171
    %v1173 = vmul.f32 %v1143, 1.442695
    %v1174 = vpow.pop %v1173
    %v1175 = vmul.f32 %v1144, 1.442695
    %v1176 = vpow.pop %v1175
    %1177 = vadd.xlane.f32.xlu0 %v1146
    %v1178 = vpop.xlane.xlu0 %1177
    %1179 = vadd.xlane.f32.xlu0 %v1148
    %v1180 = vpop.xlane.xlu0 %1179
    %1181 = vadd.xlane.f32.xlu0 %v1150
    %v1182 = vpop.xlane.xlu0 %1181
    %1183 = vadd.xlane.f32.xlu0 %v1152
    %v1184 = vpop.xlane.xlu0 %1183
    %1185 = vadd.xlane.f32.xlu0 %v1154
    %v1186 = vpop.xlane.xlu0 %1185
    %1187 = vadd.xlane.f32.xlu0 %v1156
    %v1188 = vpop.xlane.xlu0 %1187
    %1189 = vadd.xlane.f32.xlu0 %v1158
    %v1190 = vpop.xlane.xlu0 %1189
    %1191 = vadd.xlane.f32.xlu0 %v1160
    %v1192 = vpop.xlane.xlu0 %1191
    %1193 = vadd.xlane.f32.xlu0 %v1162
    %v1194 = vpop.xlane.xlu0 %1193
    %1195 = vadd.xlane.f32.xlu0 %v1164
    %v1196 = vpop.xlane.xlu0 %1195
    %1197 = vadd.xlane.f32.xlu0 %v1166
    %v1198 = vpop.xlane.xlu0 %1197
    %1199 = vadd.xlane.f32.xlu0 %v1168
    %v1200 = vpop.xlane.xlu0 %1199
    %1201 = vadd.xlane.f32.xlu0 %v1170
    %v1202 = vpop.xlane.xlu0 %1201
    %1203 = vadd.xlane.f32.xlu0 %v1172
    %v1204 = vpop.xlane.xlu0 %1203
    %1205 = vadd.xlane.f32.xlu0 %v1174
    %v1206 = vpop.xlane.xlu0 %1205
    %1207 = vadd.xlane.f32.xlu0 %v1176
    %v1208 = vpop.xlane.xlu0 %1207
    %v1209 = vrcp.pop %v1178
    %v1210 = vrcp.pop %v1180
    %v1211 = vrcp.pop %v1182
    %v1212 = vrcp.pop %v1184
    %v1213 = vrcp.pop %v1186
    %v1214 = vrcp.pop %v1188
    %v1215 = vrcp.pop %v1190
    %v1216 = vrcp.pop %v1192
    %v1217 = vrcp.pop %v1194
    %v1218 = vrcp.pop %v1196
    %v1219 = vrcp.pop %v1198
    %v1220 = vrcp.pop %v1200
    %v1221 = vrcp.pop %v1202
    %v1222 = vrcp.pop %v1204
    %v1223 = vrcp.pop %v1206
    %v1224 = vrcp.pop %v1208
    %v1225 = vmul.f32 %v1146, %v1209
    %v1226 = vmul.f32 %v1148, %v1210
    %v1227 = vmul.f32 %v1150, %v1211
    %v1228 = vmul.f32 %v1152, %v1212
    %v1229 = vmul.f32 %v1154, %v1213
    %v1230 = vmul.f32 %v1156, %v1214
    %v1231 = vmul.f32 %v1158, %v1215
    %v1232 = vmul.f32 %v1160, %v1216
    %v1233 = vmul.f32 %v1162, %v1217
    %v1234 = vmul.f32 %v1164, %v1218
    %v1235 = vmul.f32 %v1166, %v1219
    %v1236 = vmul.f32 %v1168, %v1220
    %v1237 = vmul.f32 %v1170, %v1221
    %v1238 = vmul.f32 %v1172, %v1222
    %v1239 = vmul.f32 %v1174, %v1223
    %v1240 = vmul.f32 %v1176, %v1224
    %v1241 = vpack.c.bf16 %v1226, %v1225
    %v1242 = vpack.c.bf16 %v1228, %v1227
    %v1243 = vpack.c.bf16 %v1230, %v1229
    %v1244 = vpack.c.bf16 %v1232, %v1231
    %v1245 = vpack.c.bf16 %v1234, %v1233
    %v1246 = vpack.c.bf16 %v1236, %v1235
    %v1247 = vpack.c.bf16 %v1238, %v1237
    %v1248 = vpack.c.bf16 %v1240, %v1239
    %1249 = vmatprep.subr.bf16.mxu0 0
    %1250 = vmatpush1.bf16.msra.mxu0 %v845
    %1251 = vmatprep.subr.bf16.mxu0 0
    %1252 = vmatpush1.bf16.msra.mxu0 %v847
    %1253 = vmatprep.subr.bf16.mxu0 0
    %1254 = vmatpush1.bf16.msra.mxu0 %v849
    %1255 = vmatprep.subr.bf16.mxu0 0
    %1256 = vmatpush1.bf16.msra.mxu0 %v851
    %1257 = vmatprep.subr.bf16.mxu0 0
    %1258 = vmatpush1.bf16.msra.mxu0 %v853
    %1259 = vmatprep.subr.bf16.mxu0 0
    %1260 = vmatpush1.bf16.msra.mxu0 %v855
    %1261 = vmatprep.subr.bf16.mxu0 0
    %1262 = vmatpush1.bf16.msra.mxu0 %v857
    %1263 = vmatprep.subr.bf16.mxu0 0
    %1264 = vmatpush1.bf16.msra.mxu0 %v859
    %1265 = vmatprep.subr.bf16.mxu0 0
    %1266 = vmatpush1.bf16.msra.mxu0 0
    %1267 = vmatprep.subr.bf16.mxu0 0
    %1268 = vmatpush1.bf16.msra.mxu0 0
    %1269 = vmatprep.subr.bf16.mxu0 0
    %1270 = vmatpush1.bf16.msra.mxu0 0
    %1271 = vmatprep.subr.bf16.mxu0 0
    %1272 = vmatpush1.bf16.msra.mxu0 0
    %1273 = vmatprep.subr.bf16.mxu0 0
    %1274 = vmatpush1.bf16.msra.mxu0 0
    %1275 = vmatprep.subr.bf16.mxu0 0
    %1276 = vmatpush1.bf16.msra.mxu0 0
    %1277 = vmatprep.subr.bf16.mxu0 0
    %1278 = vmatpush1.bf16.msra.mxu0 0
    %1279 = vmatprep.subr.bf16.mxu0 0
    %1280 = vmatpush1.bf16.msra.mxu0 0
    %1281 = vmatprep.mubr.bf16.mxu0 0
    %1282 = vmatmul.mubr.bf16.gmra.mrb[0].mxu0 %v1241
    %v1283 = vpop.f32.mrb[0].mxu0
    %v1284 = vadd.f32 0.0, %v1283
    %v1285 = vpop.f32.mrb[0].mxu0
    %v1286 = vpop.f32.mrb[0].mxu0
    %v1287 = vadd.f32 0.0, %v1286
    %v1288 = vpop.f32.mrb[0].mxu0
    %1289 = vmatprep.mubr.bf16.mxu0 0
    %1290 = vmatmul.mubr.bf16.gmra.mrb[0].mxu0 %v1242
    %v1291 = vpop.f32.mrb[0].mxu0
    %v1292 = vadd.f32 0.0, %v1291
    %v1293 = vpop.f32.mrb[0].mxu0
    %v1294 = vpop.f32.mrb[0].mxu0
    %v1295 = vadd.f32 0.0, %v1294
    %v1296 = vpop.f32.mrb[0].mxu0
    %1297 = vmatprep.mubr.bf16.mxu0 0
    %1298 = vmatmul.mubr.bf16.gmra.mrb[0].mxu0 %v1243
    %v1299 = vpop.f32.mrb[0].mxu0
    %v1300 = vadd.f32 0.0, %v1299
    %v1301 = vpop.f32.mrb[0].mxu0
    %v1302 = vpop.f32.mrb[0].mxu0
    %v1303 = vadd.f32 0.0, %v1302
    %v1304 = vpop.f32.mrb[0].mxu0
    %1305 = vmatprep.mubr.bf16.mxu0 0
    %1306 = vmatmul.mubr.bf16.gmra.mrb[0].mxu0 %v1244
    %v1307 = vpop.f32.mrb[0].mxu0
    %v1308 = vadd.f32 0.0, %v1307
    %v1309 = vpop.f32.mrb[0].mxu0
    %v1310 = vpop.f32.mrb[0].mxu0
    %v1311 = vadd.f32 0.0, %v1310
    %v1312 = vpop.f32.mrb[0].mxu0
    %1313 = vmatprep.mubr.bf16.mxu0 0
    %1314 = vmatmul.mubr.bf16.gmra.mrb[0].mxu0 %v1245
    %v1315 = vpop.f32.mrb[0].mxu0
    %v1316 = vadd.f32 0.0, %v1315
    %v1317 = vpop.f32.mrb[0].mxu0
    %v1318 = vpop.f32.mrb[0].mxu0
    %v1319 = vadd.f32 0.0, %v1318
    %v1320 = vpop.f32.mrb[0].mxu0
    %1321 = vmatprep.mubr.bf16.mxu0 0
    %1322 = vmatmul.mubr.bf16.gmra.mrb[0].mxu0 %v1246
    %v1323 = vpop.f32.mrb[0].mxu0
    %v1324 = vadd.f32 0.0, %v1323
    %v1325 = vpop.f32.mrb[0].mxu0
    %v1326 = vpop.f32.mrb[0].mxu0
    %v1327 = vadd.f32 0.0, %v1326
    %v1328 = vpop.f32.mrb[0].mxu0
    %1329 = vmatprep.mubr.bf16.mxu0 0
    %1330 = vmatmul.mubr.bf16.gmra.mrb[0].mxu0 %v1247
    %v1331 = vpop.f32.mrb[0].mxu0
    %v1332 = vadd.f32 0.0, %v1331
    %v1333 = vpop.f32.mrb[0].mxu0
    %v1334 = vpop.f32.mrb[0].mxu0
    %v1335 = vadd.f32 0.0, %v1334
    %v1336 = vpop.f32.mrb[0].mxu0
    %1337 = vmatprep.mubr.bf16.mxu0 0
    %1338 = vmatmul.mubr.bf16.gmra.mrb[0].mxu0 %v1248
    %v1339 = vpop.f32.mrb[0].mxu0
    %v1340 = vadd.f32 0.0, %v1339
    %v1341 = vpop.f32.mrb[0].mxu0
    %v1342 = vpop.f32.mrb[0].mxu0
    %v1343 = vadd.f32 0.0, %v1342
    %v1344 = vpop.f32.mrb[0].mxu0
    %1345 = vdwg.mxu0
    %1346 = vst.msk [vmem:[%s2] sm:$0xff] %vm900, %v1284
    %1347 = vst.msk [vmem:[%s2 + $0x8] sm:$0xff] %vm900, %v1287
    %1348 = vst.msk [vmem:[%s2 + $0x10] sm:$0xff] %vm900, %v1292
    %1349 = vst.msk [vmem:[%s2 + $0x18] sm:$0xff] %vm900, %v1295
    %1350 = vst.msk [vmem:[%s2 + $0x20] sm:$0xff] %vm900, %v1300
    %1351 = vst.msk [vmem:[%s2 + $0x28] sm:$0xff] %vm900, %v1303
    %1352 = vst.msk [vmem:[%s2 + $0x30] sm:$0xff] %vm900, %v1308
    %1353 = vst.msk [vmem:[%s2 + $0x38] sm:$0xff] %vm900, %v1311
    %1354 = vst.msk [vmem:[%s2 + $0x40] sm:$0xff] %vm900, %v1316
    %1355 = vst.msk [vmem:[%s2 + $0x48] sm:$0xff] %vm900, %v1319
    %1356 = vst.msk [vmem:[%s2 + $0x50] sm:$0xff] %vm900, %v1324
    %1357 = vst.msk [vmem:[%s2 + $0x58] sm:$0xff] %vm900, %v1327
    %1358 = vst.msk [vmem:[%s2 + $0x60] sm:$0xff] %vm900, %v1332
    %1359 = vst.msk [vmem:[%s2 + $0x68] sm:$0xff] %vm900, %v1335
    %1360 = vst.msk [vmem:[%s2 + $0x70] sm:$0xff] %vm900, %v1340
    %1361 = vst.msk [vmem:[%s2 + $0x78] sm:$0xff] %vm900, %v1343
    %1370 = vrot.lane.b32.xlu0 %v860, 64
    %v1371 = vpop.permute.xlu0 %1370
    %1372 = vrot.lane.b32.xlu0 %v862, 64
    %v1373 = vpop.permute.xlu0 %1372
    %1374 = vrot.lane.b32.xlu0 %v864, 64
    %v1375 = vpop.permute.xlu0 %1374
    %1376 = vrot.lane.b32.xlu0 %v866, 64
    %v1377 = vpop.permute.xlu0 %1376
    %1378 = vrot.lane.b32.xlu0 %v868, 64
    %v1379 = vpop.permute.xlu0 %1378
    %1380 = vrot.lane.b32.xlu0 %v870, 64
    %v1381 = vpop.permute.xlu0 %1380
    %1382 = vrot.lane.b32.xlu0 %v872, 64
    %v1383 = vpop.permute.xlu0 %1382
    %1384 = vrot.lane.b32.xlu0 %v874, 64
    %v1385 = vpop.permute.xlu0 %1384
    %v1387 = vsel %vm900, %v860, 0
    %v1390 = vsel %vm900, %v862, 0
    %v1393 = vsel %vm900, %v864, 0
    %v1396 = vsel %vm900, %v866, 0
    %v1399 = vsel %vm900, %v868, 0
    %v1402 = vsel %vm900, %v870, 0
    %v1405 = vsel %vm900, %v872, 0
    %v1408 = vsel %vm900, %v874, 0
    %v1411 = vsel %vm900, %v1371, 0
    %v1414 = vsel %vm900, %v1373, 0
    %v1417 = vsel %vm900, %v1375, 0
    %v1420 = vsel %vm900, %v1377, 0
    %v1423 = vsel %vm900, %v1379, 0
    %v1426 = vsel %vm900, %v1381, 0
    %v1429 = vsel %vm900, %v1383, 0
    %v1432 = vsel %vm900, %v1385, 0
    %1434 = vmatprep.subr.bf16.mxu0 0
    %1435 = vmatpush1.bf16.xpose.msra.mxu0 %v1411
    %1436 = vmatprep.subr.bf16.mxu0 0
    %1437 = vmatpush1.bf16.xpose.msra.mxu0 %v1414
    %1438 = vmatprep.subr.bf16.mxu0 0
    %1439 = vmatpush1.bf16.xpose.msra.mxu0 %v1417
    %1440 = vmatprep.subr.bf16.mxu0 0
    %1441 = vmatpush1.bf16.xpose.msra.mxu0 %v1420
    %1442 = vmatprep.subr.bf16.mxu0 0
    %1443 = vmatpush1.bf16.xpose.msra.mxu0 %v1423
    %1444 = vmatprep.subr.bf16.mxu0 0
    %1445 = vmatpush1.bf16.xpose.msra.mxu0 %v1426
    %1446 = vmatprep.subr.bf16.mxu0 0
    %1447 = vmatpush1.bf16.xpose.msra.mxu0 %v1429
    %1448 = vmatprep.subr.bf16.mxu0 0
    %1449 = vmatpush1.bf16.xpose.msra.mxu0 %v1432
    %1450 = vmatprep.subr.bf16.mxu0 0
    %1451 = vmatpush1.bf16.xpose.msra.mxu0 0
    %1452 = vmatprep.subr.bf16.mxu0 0
    %1453 = vmatpush1.bf16.xpose.msra.mxu0 0
    %1454 = vmatprep.subr.bf16.mxu0 0
    %1455 = vmatpush1.bf16.xpose.msra.mxu0 0
    %1456 = vmatprep.subr.bf16.mxu0 0
    %1457 = vmatpush1.bf16.xpose.msra.mxu0 0
    %1458 = vmatprep.subr.bf16.mxu0 0
    %1459 = vmatpush1.bf16.xpose.msra.mxu0 0
    %1460 = vmatprep.subr.bf16.mxu0 0
    %1461 = vmatpush1.bf16.xpose.msra.mxu0 0
    %1462 = vmatprep.subr.bf16.mxu0 0
    %1463 = vmatpush1.bf16.xpose.msra.mxu0 0
    %1464 = vmatprep.subr.bf16.mxu0 0
    %1465 = vmatpush1.bf16.xpose.msra.mxu0 0
    %1466 = vmatprep.mubr.bf16.mxu0 0
    %1467 = vmatmul.mubr.bf16.gmra.mrb[0].mxu0 %v1387
    %v1468 = vpop.f32.mrb[0].mxu0
    %v1469 = vadd.f32 0.0, %v1468
    %v1470 = vpop.f32.mrb[0].mxu0
    %v1471 = vpop.f32.mrb[0].mxu0
    %v1472 = vadd.f32 0.0, %v1471
    %v1473 = vpop.f32.mrb[0].mxu0
    %1474 = vmatprep.mubr.bf16.mxu0 0
    %1475 = vmatmul.mubr.bf16.gmra.mrb[0].mxu0 %v1390
    %v1476 = vpop.f32.mrb[0].mxu0
    %v1477 = vadd.f32 0.0, %v1476
    %v1478 = vpop.f32.mrb[0].mxu0
    %v1479 = vpop.f32.mrb[0].mxu0
    %v1480 = vadd.f32 0.0, %v1479
    %v1481 = vpop.f32.mrb[0].mxu0
    %1482 = vmatprep.mubr.bf16.mxu0 0
    %1483 = vmatmul.mubr.bf16.gmra.mrb[0].mxu0 %v1393
    %v1484 = vpop.f32.mrb[0].mxu0
    %v1485 = vadd.f32 0.0, %v1484
    %v1486 = vpop.f32.mrb[0].mxu0
    %v1487 = vpop.f32.mrb[0].mxu0
    %v1488 = vadd.f32 0.0, %v1487
    %v1489 = vpop.f32.mrb[0].mxu0
    %1490 = vmatprep.mubr.bf16.mxu0 0
    %1491 = vmatmul.mubr.bf16.gmra.mrb[0].mxu0 %v1396
    %v1492 = vpop.f32.mrb[0].mxu0
    %v1493 = vadd.f32 0.0, %v1492
    %v1494 = vpop.f32.mrb[0].mxu0
    %v1495 = vpop.f32.mrb[0].mxu0
    %v1496 = vadd.f32 0.0, %v1495
    %v1497 = vpop.f32.mrb[0].mxu0
    %1498 = vmatprep.mubr.bf16.mxu0 0
    %1499 = vmatmul.mubr.bf16.gmra.mrb[0].mxu0 %v1399
    %v1500 = vpop.f32.mrb[0].mxu0
    %v1501 = vadd.f32 0.0, %v1500
    %v1502 = vpop.f32.mrb[0].mxu0
    %v1503 = vpop.f32.mrb[0].mxu0
    %v1504 = vadd.f32 0.0, %v1503
    %v1505 = vpop.f32.mrb[0].mxu0
    %1506 = vmatprep.mubr.bf16.mxu0 0
    %1507 = vmatmul.mubr.bf16.gmra.mrb[0].mxu0 %v1402
    %v1508 = vpop.f32.mrb[0].mxu0
    %v1509 = vadd.f32 0.0, %v1508
    %v1510 = vpop.f32.mrb[0].mxu0
    %v1511 = vpop.f32.mrb[0].mxu0
    %v1512 = vadd.f32 0.0, %v1511
    %v1513 = vpop.f32.mrb[0].mxu0
    %1514 = vmatprep.mubr.bf16.mxu0 0
    %1515 = vmatmul.mubr.bf16.gmra.mrb[0].mxu0 %v1405
    %v1516 = vpop.f32.mrb[0].mxu0
    %v1517 = vadd.f32 0.0, %v1516
    %v1518 = vpop.f32.mrb[0].mxu0
    %v1519 = vpop.f32.mrb[0].mxu0
    %v1520 = vadd.f32 0.0, %v1519
    %v1521 = vpop.f32.mrb[0].mxu0
    %1522 = vmatprep.mubr.bf16.mxu0 0
    %1523 = vmatmul.mubr.bf16.gmra.mrb[0].mxu0 %v1408
    %v1524 = vpop.f32.mrb[0].mxu0
    %v1525 = vadd.f32 0.0, %v1524
    %v1526 = vpop.f32.mrb[0].mxu0
    %v1527 = vpop.f32.mrb[0].mxu0
    %v1528 = vadd.f32 0.0, %v1527
    %v1529 = vpop.f32.mrb[0].mxu0
    %1530 = vdwg.mxu0
    %v1531 = vsel %vm1065, %v1469, -1e+30
    %v1532 = vsel %vm1066, %v1472, -1e+30
    %v1533 = vsel %vm1067, %v1477, -1e+30
    %v1534 = vsel %vm1068, %v1480, -1e+30
    %v1535 = vsel %vm1069, %v1485, -1e+30
    %v1536 = vsel %vm1070, %v1488, -1e+30
    %v1537 = vsel %vm1071, %v1493, -1e+30
    %v1538 = vsel %vm1072, %v1496, -1e+30
    %v1539 = vsel %vm1073, %v1501, -1e+30
    %v1540 = vsel %vm1074, %v1504, -1e+30
    %v1541 = vsel %vm1075, %v1509, -1e+30
    %v1542 = vsel %vm1076, %v1512, -1e+30
    %v1543 = vsel %vm1077, %v1517, -1e+30
    %v1544 = vsel %vm1078, %v1520, -1e+30
    %v1545 = vsel %vm1079, %v1525, -1e+30
    %v1546 = vsel %vm1080, %v1528, -1e+30
    %1547 = vmax.xlane.f32.xlu0 %v1531
    %v1548 = vpop.xlane.xlu0 %1547
    %1549 = vmax.xlane.f32.xlu0 %v1532
    %v1550 = vpop.xlane.xlu0 %1549
    %1551 = vmax.xlane.f32.xlu0 %v1533
    %v1552 = vpop.xlane.xlu0 %1551
    %1553 = vmax.xlane.f32.xlu0 %v1534
    %v1554 = vpop.xlane.xlu0 %1553
    %1555 = vmax.xlane.f32.xlu0 %v1535
    %v1556 = vpop.xlane.xlu0 %1555
    %1557 = vmax.xlane.f32.xlu0 %v1536
    %v1558 = vpop.xlane.xlu0 %1557
    %1559 = vmax.xlane.f32.xlu0 %v1537
    %v1560 = vpop.xlane.xlu0 %1559
    %1561 = vmax.xlane.f32.xlu0 %v1538
    %v1562 = vpop.xlane.xlu0 %1561
    %1563 = vmax.xlane.f32.xlu0 %v1539
    %v1564 = vpop.xlane.xlu0 %1563
    %1565 = vmax.xlane.f32.xlu0 %v1540
    %v1566 = vpop.xlane.xlu0 %1565
    %1567 = vmax.xlane.f32.xlu0 %v1541
    %v1568 = vpop.xlane.xlu0 %1567
    %1569 = vmax.xlane.f32.xlu0 %v1542
    %v1570 = vpop.xlane.xlu0 %1569
    %1571 = vmax.xlane.f32.xlu0 %v1543
    %v1572 = vpop.xlane.xlu0 %1571
    %1573 = vmax.xlane.f32.xlu0 %v1544
    %v1574 = vpop.xlane.xlu0 %1573
    %1575 = vmax.xlane.f32.xlu0 %v1545
    %v1576 = vpop.xlane.xlu0 %1575
    %1577 = vmax.xlane.f32.xlu0 %v1546
    %v1578 = vpop.xlane.xlu0 %1577
    %v1579 = vsub.f32 %v1531, %v1548
    %v1580 = vsub.f32 %v1532, %v1550
    %v1581 = vsub.f32 %v1533, %v1552
    %v1582 = vsub.f32 %v1534, %v1554
    %v1583 = vsub.f32 %v1535, %v1556
    %v1584 = vsub.f32 %v1536, %v1558
    %v1585 = vsub.f32 %v1537, %v1560
    %v1586 = vsub.f32 %v1538, %v1562
    %v1587 = vsub.f32 %v1539, %v1564
    %v1588 = vsub.f32 %v1540, %v1566
    %v1589 = vsub.f32 %v1541, %v1568
    %v1590 = vsub.f32 %v1542, %v1570
    %v1591 = vsub.f32 %v1543, %v1572
    %v1592 = vsub.f32 %v1544, %v1574
    %v1593 = vsub.f32 %v1545, %v1576
    %v1594 = vsub.f32 %v1546, %v1578
    %v1595 = vmul.f32 %v1579, 1.442695
    %v1596 = vpow.pop %v1595
    %v1597 = vmul.f32 %v1580, 1.442695
    %v1598 = vpow.pop %v1597
    %v1599 = vmul.f32 %v1581, 1.442695
    %v1600 = vpow.pop %v1599
    %v1601 = vmul.f32 %v1582, 1.442695
    %v1602 = vpow.pop %v1601
    %v1603 = vmul.f32 %v1583, 1.442695
    %v1604 = vpow.pop %v1603
    %v1605 = vmul.f32 %v1584, 1.442695
    %v1606 = vpow.pop %v1605
    %v1607 = vmul.f32 %v1585, 1.442695
    %v1608 = vpow.pop %v1607
    %v1609 = vmul.f32 %v1586, 1.442695
    %v1610 = vpow.pop %v1609
    %v1611 = vmul.f32 %v1587, 1.442695
    %v1612 = vpow.pop %v1611
    %v1613 = vmul.f32 %v1588, 1.442695
    %v1614 = vpow.pop %v1613
    %v1615 = vmul.f32 %v1589, 1.442695
    %v1616 = vpow.pop %v1615
    %v1617 = vmul.f32 %v1590, 1.442695
    %v1618 = vpow.pop %v1617
    %v1619 = vmul.f32 %v1591, 1.442695
    %v1620 = vpow.pop %v1619
    %v1621 = vmul.f32 %v1592, 1.442695
    %v1622 = vpow.pop %v1621
    %v1623 = vmul.f32 %v1593, 1.442695
    %v1624 = vpow.pop %v1623
    %v1625 = vmul.f32 %v1594, 1.442695
    %v1626 = vpow.pop %v1625
    %1627 = vadd.xlane.f32.xlu0 %v1596
    %v1628 = vpop.xlane.xlu0 %1627
    %1629 = vadd.xlane.f32.xlu0 %v1598
    %v1630 = vpop.xlane.xlu0 %1629
    %1631 = vadd.xlane.f32.xlu0 %v1600
    %v1632 = vpop.xlane.xlu0 %1631
    %1633 = vadd.xlane.f32.xlu0 %v1602
    %v1634 = vpop.xlane.xlu0 %1633
    %1635 = vadd.xlane.f32.xlu0 %v1604
    %v1636 = vpop.xlane.xlu0 %1635
    %1637 = vadd.xlane.f32.xlu0 %v1606
    %v1638 = vpop.xlane.xlu0 %1637
    %1639 = vadd.xlane.f32.xlu0 %v1608
    %v1640 = vpop.xlane.xlu0 %1639
    %1641 = vadd.xlane.f32.xlu0 %v1610
    %v1642 = vpop.xlane.xlu0 %1641
    %1643 = vadd.xlane.f32.xlu0 %v1612
    %v1644 = vpop.xlane.xlu0 %1643
    %1645 = vadd.xlane.f32.xlu0 %v1614
    %v1646 = vpop.xlane.xlu0 %1645
    %1647 = vadd.xlane.f32.xlu0 %v1616
    %v1648 = vpop.xlane.xlu0 %1647
    %1649 = vadd.xlane.f32.xlu0 %v1618
    %v1650 = vpop.xlane.xlu0 %1649
    %1651 = vadd.xlane.f32.xlu0 %v1620
    %v1652 = vpop.xlane.xlu0 %1651
    %1653 = vadd.xlane.f32.xlu0 %v1622
    %v1654 = vpop.xlane.xlu0 %1653
    %1655 = vadd.xlane.f32.xlu0 %v1624
    %v1656 = vpop.xlane.xlu0 %1655
    %1657 = vadd.xlane.f32.xlu0 %v1626
    %v1658 = vpop.xlane.xlu0 %1657
    %v1659 = vrcp.pop %v1628
    %v1660 = vrcp.pop %v1630
    %v1661 = vrcp.pop %v1632
    %v1662 = vrcp.pop %v1634
    %v1663 = vrcp.pop %v1636
    %v1664 = vrcp.pop %v1638
    %v1665 = vrcp.pop %v1640
    %v1666 = vrcp.pop %v1642
    %v1667 = vrcp.pop %v1644
    %v1668 = vrcp.pop %v1646
    %v1669 = vrcp.pop %v1648
    %v1670 = vrcp.pop %v1650
    %v1671 = vrcp.pop %v1652
    %v1672 = vrcp.pop %v1654
    %v1673 = vrcp.pop %v1656
    %v1674 = vrcp.pop %v1658
    %v1675 = vmul.f32 %v1596, %v1659
    %v1676 = vmul.f32 %v1598, %v1660
    %v1677 = vmul.f32 %v1600, %v1661
    %v1678 = vmul.f32 %v1602, %v1662
    %v1679 = vmul.f32 %v1604, %v1663
    %v1680 = vmul.f32 %v1606, %v1664
    %v1681 = vmul.f32 %v1608, %v1665
    %v1682 = vmul.f32 %v1610, %v1666
    %v1683 = vmul.f32 %v1612, %v1667
    %v1684 = vmul.f32 %v1614, %v1668
    %v1685 = vmul.f32 %v1616, %v1669
    %v1686 = vmul.f32 %v1618, %v1670
    %v1687 = vmul.f32 %v1620, %v1671
    %v1688 = vmul.f32 %v1622, %v1672
    %v1689 = vmul.f32 %v1624, %v1673
    %v1690 = vmul.f32 %v1626, %v1674
    %v1691 = vpack.c.bf16 %v1676, %v1675
    %v1692 = vpack.c.bf16 %v1678, %v1677
    %v1693 = vpack.c.bf16 %v1680, %v1679
    %v1694 = vpack.c.bf16 %v1682, %v1681
    %v1695 = vpack.c.bf16 %v1684, %v1683
    %v1696 = vpack.c.bf16 %v1686, %v1685
    %v1697 = vpack.c.bf16 %v1688, %v1687
    %v1698 = vpack.c.bf16 %v1690, %v1689
    %1699 = vmatprep.subr.bf16.mxu0 0
    %1700 = vmatpush1.bf16.msra.mxu0 %v861
    %1701 = vmatprep.subr.bf16.mxu0 0
    %1702 = vmatpush1.bf16.msra.mxu0 %v863
    %1703 = vmatprep.subr.bf16.mxu0 0
    %1704 = vmatpush1.bf16.msra.mxu0 %v865
    %1705 = vmatprep.subr.bf16.mxu0 0
    %1706 = vmatpush1.bf16.msra.mxu0 %v867
    %1707 = vmatprep.subr.bf16.mxu0 0
    %1708 = vmatpush1.bf16.msra.mxu0 %v869
    %1709 = vmatprep.subr.bf16.mxu0 0
    %1710 = vmatpush1.bf16.msra.mxu0 %v871
    %1711 = vmatprep.subr.bf16.mxu0 0
    %1712 = vmatpush1.bf16.msra.mxu0 %v873
    %1713 = vmatprep.subr.bf16.mxu0 0
    %1714 = vmatpush1.bf16.msra.mxu0 %v875
    %1715 = vmatprep.subr.bf16.mxu0 0
    %1716 = vmatpush1.bf16.msra.mxu0 0
    %1717 = vmatprep.subr.bf16.mxu0 0
    %1718 = vmatpush1.bf16.msra.mxu0 0
    %1719 = vmatprep.subr.bf16.mxu0 0
    %1720 = vmatpush1.bf16.msra.mxu0 0
    %1721 = vmatprep.subr.bf16.mxu0 0
    %1722 = vmatpush1.bf16.msra.mxu0 0
    %1723 = vmatprep.subr.bf16.mxu0 0
    %1724 = vmatpush1.bf16.msra.mxu0 0
    %1725 = vmatprep.subr.bf16.mxu0 0
    %1726 = vmatpush1.bf16.msra.mxu0 0
    %1727 = vmatprep.subr.bf16.mxu0 0
    %1728 = vmatpush1.bf16.msra.mxu0 0
    %1729 = vmatprep.subr.bf16.mxu0 0
    %1730 = vmatpush1.bf16.msra.mxu0 0
    %1731 = vmatprep.mubr.bf16.mxu0 0
    %1732 = vmatmul.mubr.bf16.gmra.mrb[0].mxu0 %v1691
    %v1733 = vpop.f32.mrb[0].mxu0
    %v1734 = vadd.f32 0.0, %v1733
    %v1735 = vpop.f32.mrb[0].mxu0
    %v1736 = vpop.f32.mrb[0].mxu0
    %v1737 = vadd.f32 0.0, %v1736
    %v1738 = vpop.f32.mrb[0].mxu0
    %1739 = vmatprep.mubr.bf16.mxu0 0
    %1740 = vmatmul.mubr.bf16.gmra.mrb[0].mxu0 %v1692
    %v1741 = vpop.f32.mrb[0].mxu0
    %v1742 = vadd.f32 0.0, %v1741
    %v1743 = vpop.f32.mrb[0].mxu0
    %v1744 = vpop.f32.mrb[0].mxu0
    %v1745 = vadd.f32 0.0, %v1744
    %v1746 = vpop.f32.mrb[0].mxu0
    %1747 = vmatprep.mubr.bf16.mxu0 0
    %1748 = vmatmul.mubr.bf16.gmra.mrb[0].mxu0 %v1693
    %v1749 = vpop.f32.mrb[0].mxu0
    %v1750 = vadd.f32 0.0, %v1749
    %v1751 = vpop.f32.mrb[0].mxu0
    %v1752 = vpop.f32.mrb[0].mxu0
    %v1753 = vadd.f32 0.0, %v1752
    %v1754 = vpop.f32.mrb[0].mxu0
    %1755 = vmatprep.mubr.bf16.mxu0 0
    %1756 = vmatmul.mubr.bf16.gmra.mrb[0].mxu0 %v1694
    %v1757 = vpop.f32.mrb[0].mxu0
    %v1758 = vadd.f32 0.0, %v1757
    %v1759 = vpop.f32.mrb[0].mxu0
    %v1760 = vpop.f32.mrb[0].mxu0
    %v1761 = vadd.f32 0.0, %v1760
    %v1762 = vpop.f32.mrb[0].mxu0
    %1763 = vmatprep.mubr.bf16.mxu0 0
    %1764 = vmatmul.mubr.bf16.gmra.mrb[0].mxu0 %v1695
    %v1765 = vpop.f32.mrb[0].mxu0
    %v1766 = vadd.f32 0.0, %v1765
    %v1767 = vpop.f32.mrb[0].mxu0
    %v1768 = vpop.f32.mrb[0].mxu0
    %v1769 = vadd.f32 0.0, %v1768
    %v1770 = vpop.f32.mrb[0].mxu0
    %1771 = vmatprep.mubr.bf16.mxu0 0
    %1772 = vmatmul.mubr.bf16.gmra.mrb[0].mxu0 %v1696
    %v1773 = vpop.f32.mrb[0].mxu0
    %v1774 = vadd.f32 0.0, %v1773
    %v1775 = vpop.f32.mrb[0].mxu0
    %v1776 = vpop.f32.mrb[0].mxu0
    %v1777 = vadd.f32 0.0, %v1776
    %v1778 = vpop.f32.mrb[0].mxu0
    %1779 = vmatprep.mubr.bf16.mxu0 0
    %1780 = vmatmul.mubr.bf16.gmra.mrb[0].mxu0 %v1697
    %v1781 = vpop.f32.mrb[0].mxu0
    %v1782 = vadd.f32 0.0, %v1781
    %v1783 = vpop.f32.mrb[0].mxu0
    %v1784 = vpop.f32.mrb[0].mxu0
    %v1785 = vadd.f32 0.0, %v1784
    %v1786 = vpop.f32.mrb[0].mxu0
    %1787 = vmatprep.mubr.bf16.mxu0 0
    %1788 = vmatmul.mubr.bf16.gmra.mrb[0].mxu0 %v1698
    %v1789 = vpop.f32.mrb[0].mxu0
    %v1790 = vadd.f32 0.0, %v1789
    %v1791 = vpop.f32.mrb[0].mxu0
    %v1792 = vpop.f32.mrb[0].mxu0
    %v1793 = vadd.f32 0.0, %v1792
    %v1794 = vpop.f32.mrb[0].mxu0
    %1795 = vdwg.mxu0
    %s1796 = scalar_lea.vmem %s2, 128
    %1797 = vst.msk [vmem:[%s1796] sm:$0xff] %vm900, %v1734
    %1798 = vst.msk [vmem:[%s1796 + $0x8] sm:$0xff] %vm900, %v1737
    %1799 = vst.msk [vmem:[%s1796 + $0x10] sm:$0xff] %vm900, %v1742
    %1800 = vst.msk [vmem:[%s1796 + $0x18] sm:$0xff] %vm900, %v1745
    %1801 = vst.msk [vmem:[%s1796 + $0x20] sm:$0xff] %vm900, %v1750
    %1802 = vst.msk [vmem:[%s1796 + $0x28] sm:$0xff] %vm900, %v1753
    %1803 = vst.msk [vmem:[%s1796 + $0x30] sm:$0xff] %vm900, %v1758
    %1804 = vst.msk [vmem:[%s1796 + $0x38] sm:$0xff] %vm900, %v1761
    %1805 = vst.msk [vmem:[%s1796 + $0x40] sm:$0xff] %vm900, %v1766
    %1806 = vst.msk [vmem:[%s1796 + $0x48] sm:$0xff] %vm900, %v1769
    %1807 = vst.msk [vmem:[%s1796 + $0x50] sm:$0xff] %vm900, %v1774
    %1808 = vst.msk [vmem:[%s1796 + $0x58] sm:$0xff] %vm900, %v1777
    %1809 = vst.msk [vmem:[%s1796 + $0x60] sm:$0xff] %vm900, %v1782
    %1810 = vst.msk [vmem:[%s1796 + $0x68] sm:$0xff] %vm900, %v1785
    %1811 = vst.msk [vmem:[%s1796 + $0x70] sm:$0xff] %vm900, %v1790
    %1812 = vst.msk [vmem:[%s1796 + $0x78] sm:$0xff] %vm900, %v1793
    // Predicated region
    $region14: #{tpu_custom_call.1} parent=1 // pred_check
      _
    $region15: #{tpu_custom_call.1} parent=1 // pred_check_branch
      %1814 = sbr.rel (0) target = $region17
    $region16: #{tpu_custom_call.1} parent=1 // pred_region
      _
    $region17: #{tpu_custom_call.1} parent=1 // pred_fallthru
      _
    // Predicated region
    $region18: #{tpu_custom_call.1} parent=1 // pred_check
      _
    $region19: #{tpu_custom_call.1} parent=1 // pred_check_branch
      %1816 = sbr.rel (0) target = $region21
    $region20: #{tpu_custom_call.1} parent=1 // pred_region
      _
    $region21: #{tpu_custom_call.1} parent=1 // pred_fallthru
      _
    %1817 = vsyncpa [#allocation3], 1

</llo_original>
